<compile_context>
chip_gen: v7x
topology: tpu7x:2x2x1
jax: 0.10.0
libtpu: 0.0.40
codegen_flags: <defaults>
</compile_context>

<pallas_src>
import functools

import jax
import jax.numpy as jnp
from jax import lax
from jax.experimental import pallas as pl
from jax.experimental.pallas import tpu as pltpu

# ---------------- config (small, consistent with a T5 block) ----------------
D_MODEL = 32
N_HEADS = 4
D_KV = 8
INNER = N_HEADS * D_KV          # 32
D_FF = 64
EPS = 1e-6


# ---------------------------- in-kernel helpers -----------------------------
def _rmsnorm(x_f32, w_f32):
    # T5LayerNorm: no mean subtraction, no bias; variance in fp32.
    var = jnp.mean(x_f32 * x_f32, axis=-1, keepdims=True)
    return x_f32 * lax.rsqrt(var + EPS) * w_f32


# ------------------------------ fused kernel --------------------------------
def t5_block_kernel(x_ref, ln_ref, wqkv_ref, wo_ref, wi_ref, woff_ref,
                    bias_ref, out_ref, scores_ref, ctx_ref, *, batch, seq):
    """Fused T5 block: RMSNorm -> QKV -> attention(+bias) -> O -> residual
    -> RMSNorm -> wi -> ReLU -> wo_ff -> residual.  Whole batch in one shot.

    scores_ref: VMEM scratch (B*H*S, S) f32   -- per-(b,h) score tiles
    ctx_ref:    VMEM scratch (B*S, INNER) f32 -- reassembled attention context
    """
    x = x_ref[...].astype(jnp.float32)            # (B*S, D)
    ln = ln_ref[...]                              # (2, D) f32
    ln_sa = ln[0:1, :]
    ln_ff = ln[1:2, :]

    # ---------------- self-attention sub-layer ----------------
    normed = _rmsnorm(x, ln_sa)                   # (B*S, D) f32
    # Head-major packed QKV weight: columns are [q_h | k_h | v_h] per head.
    qkv = jnp.dot(normed.astype(jnp.bfloat16), wqkv_ref[...],
                  preferred_element_type=jnp.float32)        # (B*S, 3*INNER)

    # Contract last dim of q with last dim of k (no explicit transpose).
    qk_dims = (((1,), (1,)), ((), ()))

    # Raw attention scores per (batch, head) -> scratch.  T5 has no 1/sqrt(d).
    for b in range(batch):                        # static unroll (toy dims)
        rows = slice(b * seq, (b + 1) * seq)
        for h in range(N_HEADS):
            base = h * 3 * D_KV
            qkv_bh = qkv[rows, base:base + 3 * D_KV]   # one contiguous extract
            q_bh = qkv_bh[:, 0 * D_KV:1 * D_KV].astype(jnp.bfloat16)
            k_bh = qkv_bh[:, 1 * D_KV:2 * D_KV].astype(jnp.bfloat16)
            i = b * N_HEADS + h
            scores_ref[i * seq:(i + 1) * seq, :] = lax.dot_general(
                q_bh, k_bh, qk_dims, preferred_element_type=jnp.float32)

    # Batched softmax over every (batch, head) tile at once (f32 math).
    scores = scores_ref[...] + bias_ref[...]                  # (B*H*S, S)
    m = jnp.max(scores, axis=-1, keepdims=True)
    e = jnp.exp(scores - m)
    p = e * pl.reciprocal(jnp.sum(e, axis=-1, keepdims=True), approx=True)
    p = p.astype(jnp.bfloat16)

    # Context: per (batch, head) p @ v written straight into ctx scratch
    # (original head order along lanes, so wo needs no reordering).
    for b in range(batch):
        rows = slice(b * seq, (b + 1) * seq)
        for h in range(N_HEADS):
            base = h * 3 * D_KV
            v_bh = qkv[rows, base + 2 * D_KV:base + 3 * D_KV].astype(jnp.bfloat16)
            i = b * N_HEADS + h
            p_bh = p[i * seq:(i + 1) * seq, :]                # (S, S)
            ctx_ref[rows, h * D_KV:(h + 1) * D_KV] = jnp.dot(
                p_bh, v_bh, preferred_element_type=jnp.float32)

    attn = x + jnp.dot(ctx_ref[...].astype(jnp.bfloat16), wo_ref[...],
                       preferred_element_type=jnp.float32)    # residual, f32

    # ---------------- feed-forward sub-layer ----------------
    normed2 = _rmsnorm(attn, ln_ff)
    hmid = jnp.maximum(
        jnp.dot(normed2.astype(jnp.bfloat16), wi_ref[...],
                preferred_element_type=jnp.float32), 0.0)
    y = attn + jnp.dot(hmid.astype(jnp.bfloat16), woff_ref[...],
                       preferred_element_type=jnp.float32)    # residual

    out_ref[...] = y.astype(out_ref.dtype)


# ------------------------------ wrapper --------------------------------------
def t5_block_forward(hidden_states, params, position_bias):
    """Mirrors T5Block.forward for an encoder block (no cache, no cross-attn).

    Returns (hidden_states, present_key_value_state, position_bias), like
    `outputs = (hidden_states,) + (present_key_value_state,) + attention_outputs`.
    """
    b, s, d = hidden_states.shape

    # --- weight packing (free XLA ops; fewer kernel inputs / DMA bytes) ---
    # Head-major fused QKV: [q_0 | k_0 | v_0 | q_1 | k_1 | v_1 | ...], bf16.
    blocks = []
    for h in range(N_HEADS):
        cols = slice(h * D_KV, (h + 1) * D_KV)
        blocks += [params["wq"][:, cols], params["wk"][:, cols],
                   params["wv"][:, cols]]
    wqkv = jnp.concatenate(blocks, axis=1).astype(jnp.bfloat16)   # (D, 3*INNER)
    wo = params["wo"].astype(jnp.bfloat16)
    wi = params["wi"].astype(jnp.bfloat16)
    wo_ff = params["wo_ff"].astype(jnp.bfloat16)
    ln = jnp.concatenate([params["sa_ln"], params["ff_ln"]],
                         axis=0).astype(jnp.float32)              # (2, D)

    x2 = hidden_states.reshape(b * s, d)
    # Pre-broadcast bias to the (B*H*S, S) layout the kernel consumes.
    bias_all = jnp.broadcast_to(
        position_bias[None].astype(jnp.float32),
        (b, N_HEADS, s, s)).reshape(b * N_HEADS * s, s)

    # Advisory cost estimate so XLA can overlap this tiny dispatch.
    flops = (2 * b * s * d * 3 * INNER                 # QKV
             + 2 * b * N_HEADS * s * s * D_KV * 2      # QK^T + PV
             + 2 * b * s * INNER * d                   # wo
             + 2 * b * s * d * D_FF * 2)               # wi + wo_ff
    transcendentals = b * N_HEADS * s * s + b * N_HEADS * s + 2 * b * s
    bytes_accessed = ((x2.size + ln.size + bias_all.size + b * s * d) * 4
                      + (wqkv.size + wo.size + wi.size + wo_ff.size) * 2)

    kernel = functools.partial(t5_block_kernel, batch=b, seq=s)
    out2 = pl.pallas_call(
        kernel,
        out_shape=jax.ShapeDtypeStruct((b * s, d), hidden_states.dtype),
        in_specs=[pl.BlockSpec(memory_space=pltpu.MemorySpace.VMEM)
                  for _ in range(7)],
        out_specs=pl.BlockSpec(memory_space=pltpu.MemorySpace.VMEM),
        scratch_shapes=[
            pltpu.VMEM((b * N_HEADS * s, s), jnp.float32),   # score tiles
            pltpu.VMEM((b * s, INNER), jnp.float32),         # context
        ],
        cost_estimate=pl.CostEstimate(flops=flops,
                                      transcendentals=transcendentals,
                                      bytes_accessed=bytes_accessed),
    )(x2, ln, wqkv, wo, wi, wo_ff, bias_all)

    h = out2.reshape(b, s, d)
    present_key_value_state = None   # use_cache=False / not a decoder
    return h, present_key_value_state, position_bias


# ------------------------- pure-JAX reference --------------------------------
def _rmsnorm_ref(x, w):
    var = jnp.mean(x.astype(jnp.float32) ** 2, axis=-1, keepdims=True)
    return (x * lax.rsqrt(var + EPS)) * w


def t5_block_ref(x, params, bias):
    b, s, d = x.shape
    normed = _rmsnorm_ref(x, params["sa_ln"])
    q = normed @ params["wq"]
    k = normed @ params["wk"]
    v = normed @ params["wv"]
    q = q.reshape(b, s, N_HEADS, D_KV).transpose(0, 2, 1, 3)
    k = k.reshape(b, s, N_HEADS, D_KV).transpose(0, 2, 1, 3)
    v = v.reshape(b, s, N_HEADS, D_KV).transpose(0, 2, 1, 3)
    scores = jnp.einsum("bhqd,bhkd->bhqk", q, k) + bias[None]
    p = jax.nn.softmax(scores, axis=-1)
    ctx = jnp.einsum("bhqk,bhkd->bhqd", p, v)
    ctx = ctx.transpose(0, 2, 1, 3).reshape(b, s, INNER)
    h1 = x + ctx @ params["wo"]
    normed2 = _rmsnorm_ref(h1, params["ff_ln"])
    h2 = jnp.maximum(normed2 @ params["wi"], 0.0) @ params["wo_ff"]
    return h1 + h2


# ---------------------------------- main -------------------------------------
if __name__ == "__main__":
    key = jax.random.PRNGKey(0)
    ks = jax.random.split(key, 10)
    B, S = 2, 8

    x = jax.random.normal(ks[0], (B, S, D_MODEL), jnp.float32)

    # Deterministic synthetic parameters (T5 linears have no bias).
    params = {
        "sa_ln": 1.0 + 0.1 * jax.random.normal(ks[1], (1, D_MODEL), jnp.float32),
        "wq": 0.05 * jax.random.normal(ks[2], (D_MODEL, INNER), jnp.float32),
        "wk": 0.05 * jax.random.normal(ks[3], (D_MODEL, INNER), jnp.float32),
        "wv": 0.05 * jax.random.normal(ks[4], (D_MODEL, INNER), jnp.float32),
        "wo": 0.05 * jax.random.normal(ks[5], (INNER, D_MODEL), jnp.float32),
        "ff_ln": 1.0 + 0.1 * jax.random.normal(ks[6], (1, D_MODEL), jnp.float32),
        "wi": 0.05 * jax.random.normal(ks[7], (D_MODEL, D_FF), jnp.float32),
        "wo_ff": 0.05 * jax.random.normal(ks[8], (D_FF, D_MODEL), jnp.float32),
    }

    # position_bias as passed into T5Block.forward, shape (n_heads, S, S)
    # (has_relative_attention_bias=False, so the bias is an external input).
    position_bias = 0.1 * jax.random.normal(ks[9], (N_HEADS, S, S), jnp.float32)

    out, present, bias_out = t5_block_forward(x, params, position_bias)
    out = jax.block_until_ready(out)

    ref = t5_block_ref(x, params, position_bias)
    assert out.shape == (B, S, D_MODEL)
    assert present is None
    assert bias_out is position_bias
    # Tolerance accounts for bf16 MXU operands + approx softmax reciprocal
    # against the pure-f32 reference.
    assert jnp.allclose(out, ref, atol=1e-2, rtol=1e-2), (
        f"max abs err {jnp.max(jnp.abs(out - ref))}")

    print("KERNEL_OK")
</pallas_src>

<mosaic_0001>
module attributes {stable_mosaic.version = 11 : i64} {
  func.func @t5_block_kernel(%arg0: memref<16x32xf32, #tpu.memory_space<vmem>>, %arg1: memref<2x32xf32, #tpu.memory_space<vmem>>, %arg2: memref<32x96xbf16, #tpu.memory_space<vmem>>, %arg3: memref<32x32xbf16, #tpu.memory_space<vmem>>, %arg4: memref<32x64xbf16, #tpu.memory_space<vmem>>, %arg5: memref<64x32xbf16, #tpu.memory_space<vmem>>, %arg6: memref<64x8xf32, #tpu.memory_space<vmem>>, %arg7: memref<16x32xf32, #tpu.memory_space<vmem>>, %arg8: memref<64x8xf32, #tpu.memory_space<vmem>>, %arg9: memref<16x32xf32, #tpu.memory_space<vmem>>) attributes {dimension_semantics = [], scalar_prefetch = 0 : i64, scratch_operands = 2 : i64, tpu.core_type = #tpu.core_type<tc>} {
    %c0 = arith.constant 0 : index
    %c0_0 = arith.constant 0 : index
    %0 = vector.load %arg0[%c0, %c0_0] : memref<16x32xf32, #tpu.memory_space<vmem>>, vector<16x32xf32>
    %c0_1 = arith.constant 0 : index
    %c0_2 = arith.constant 0 : index
    %1 = vector.load %arg1[%c0_1, %c0_2] : memref<2x32xf32, #tpu.memory_space<vmem>>, vector<2x32xf32>
    %2 = vector.extract_strided_slice %1 {offsets = [0, 0], sizes = [1, 32], strides = [1, 1]} : vector<2x32xf32> to vector<1x32xf32>
    %3 = vector.extract_strided_slice %1 {offsets = [1, 0], sizes = [1, 32], strides = [1, 1]} : vector<2x32xf32> to vector<1x32xf32>
    %4 = arith.mulf %0, %0 : vector<16x32xf32>
    %cst = arith.constant dense<0.000000e+00> : vector<16xf32>
    %5 = vector.multi_reduction <add>, %4, %cst [1] : vector<16x32xf32> to vector<16xf32>
    %6 = vector.shape_cast %5 : vector<16xf32> to vector<16x1xf32>
    %cst_3 = arith.constant 3.200000e+01 : f32
    %7 = vector.broadcast %cst_3 : f32 to vector<16x1xf32>
    %8 = arith.divf %6, %7 : vector<16x1xf32>
    %cst_4 = arith.constant 9.99999997E-7 : f32
    %9 = vector.broadcast %cst_4 : f32 to vector<16x1xf32>
    %10 = arith.addf %8, %9 : vector<16x1xf32>
    %11 = math.rsqrt %10 : vector<16x1xf32>
    %12 = vector.broadcast %11 : vector<16x1xf32> to vector<16x32xf32>
    %13 = arith.mulf %0, %12 : vector<16x32xf32>
    %14 = vector.broadcast %2 : vector<1x32xf32> to vector<16x32xf32>
    %15 = arith.mulf %13, %14 : vector<16x32xf32>
    %16 = arith.truncf %15 : vector<16x32xf32> to vector<16x32xbf16>
    %c0_5 = arith.constant 0 : index
    %c0_6 = arith.constant 0 : index
    %17 = vector.load %arg2[%c0_5, %c0_6] : memref<32x96xbf16, #tpu.memory_space<vmem>>, vector<32x96xbf16>
    %cst_7 = arith.constant dense<0.000000e+00> : vector<16x96xf32>
    %18 = tpu.matmul %16, %17, %cst_7 {dimension_numbers = #tpu.dot_dimension_numbers<[1], [0], [0], [1], [0, 0, 1, 1], [], []>} : vector<16x32xbf16>, vector<32x96xbf16>, vector<16x96xf32> -> vector<16x96xf32>
    %19 = vector.extract_strided_slice %18 {offsets = [0, 0], sizes = [8, 24], strides = [1, 1]} : vector<16x96xf32> to vector<8x24xf32>
    %20 = vector.extract_strided_slice %19 {offsets = [0, 0], sizes = [8, 8], strides = [1, 1]} : vector<8x24xf32> to vector<8x8xf32>
    %21 = arith.truncf %20 : vector<8x8xf32> to vector<8x8xbf16>
    %22 = vector.extract_strided_slice %19 {offsets = [0, 8], sizes = [8, 8], strides = [1, 1]} : vector<8x24xf32> to vector<8x8xf32>
    %23 = arith.truncf %22 : vector<8x8xf32> to vector<8x8xbf16>
    %cst_8 = arith.constant dense<0.000000e+00> : vector<8x8xf32>
    %24 = tpu.matmul %21, %23, %cst_8 {dimension_numbers = #tpu.dot_dimension_numbers<[1], [1], [0], [0], [0, 0, 1, 0], [], []>} : vector<8x8xbf16>, vector<8x8xbf16>, vector<8x8xf32> -> vector<8x8xf32>
    %c0_9 = arith.constant 0 : index
    %c0_10 = arith.constant 0 : index
    %25 = vector.load %arg8[%c0_9, %c0_10] : memref<64x8xf32, #tpu.memory_space<vmem>>, vector<8x8xf32>
    tpu.vector_store %arg8[%c0_9, %c0_10], %24 {strides = array<i32>} : memref<64x8xf32, #tpu.memory_space<vmem>>, vector<8x8xf32>,
    %26 = vector.extract_strided_slice %18 {offsets = [0, 24], sizes = [8, 24], strides = [1, 1]} : vector<16x96xf32> to vector<8x24xf32>
    %27 = vector.extract_strided_slice %26 {offsets = [0, 0], sizes = [8, 8], strides = [1, 1]} : vector<8x24xf32> to vector<8x8xf32>
    %28 = arith.truncf %27 : vector<8x8xf32> to vector<8x8xbf16>
    %29 = vector.extract_strided_slice %26 {offsets = [0, 8], sizes = [8, 8], strides = [1, 1]} : vector<8x24xf32> to vector<8x8xf32>
    %30 = arith.truncf %29 : vector<8x8xf32> to vector<8x8xbf16>
    %cst_11 = arith.constant dense<0.000000e+00> : vector<8x8xf32>
    %31 = tpu.matmul %28, %30, %cst_11 {dimension_numbers = #tpu.dot_dimension_numbers<[1], [1], [0], [0], [0, 0, 1, 0], [], []>} : vector<8x8xbf16>, vector<8x8xbf16>, vector<8x8xf32> -> vector<8x8xf32>
    %c8 = arith.constant 8 : index
    %c0_12 = arith.constant 0 : index
    %32 = vector.load %arg8[%c8, %c0_12] : memref<64x8xf32, #tpu.memory_space<vmem>>, vector<8x8xf32>
    tpu.vector_store %arg8[%c8, %c0_12], %31 {strides = array<i32>} : memref<64x8xf32, #tpu.memory_space<vmem>>, vector<8x8xf32>,
    %33 = vector.extract_strided_slice %18 {offsets = [0, 48], sizes = [8, 24], strides = [1, 1]} : vector<16x96xf32> to vector<8x24xf32>
    %34 = vector.extract_strided_slice %33 {offsets = [0, 0], sizes = [8, 8], strides = [1, 1]} : vector<8x24xf32> to vector<8x8xf32>
    %35 = arith.truncf %34 : vector<8x8xf32> to vector<8x8xbf16>
    %36 = vector.extract_strided_slice %33 {offsets = [0, 8], sizes = [8, 8], strides = [1, 1]} : vector<8x24xf32> to vector<8x8xf32>
    %37 = arith.truncf %36 : vector<8x8xf32> to vector<8x8xbf16>
    %cst_13 = arith.constant dense<0.000000e+00> : vector<8x8xf32>
    %38 = tpu.matmul %35, %37, %cst_13 {dimension_numbers = #tpu.dot_dimension_numbers<[1], [1], [0], [0], [0, 0, 1, 0], [], []>} : vector<8x8xbf16>, vector<8x8xbf16>, vector<8x8xf32> -> vector<8x8xf32>
    %c16 = arith.constant 16 : index
    %c0_14 = arith.constant 0 : index
    %39 = vector.load %arg8[%c16, %c0_14] : memref<64x8xf32, #tpu.memory_space<vmem>>, vector<8x8xf32>
    tpu.vector_store %arg8[%c16, %c0_14], %38 {strides = array<i32>} : memref<64x8xf32, #tpu.memory_space<vmem>>, vector<8x8xf32>,
    %40 = vector.extract_strided_slice %18 {offsets = [0, 72], sizes = [8, 24], strides = [1, 1]} : vector<16x96xf32> to vector<8x24xf32>
    %41 = vector.extract_strided_slice %40 {offsets = [0, 0], sizes = [8, 8], strides = [1, 1]} : vector<8x24xf32> to vector<8x8xf32>
    %42 = arith.truncf %41 : vector<8x8xf32> to vector<8x8xbf16>
    %43 = vector.extract_strided_slice %40 {offsets = [0, 8], sizes = [8, 8], strides = [1, 1]} : vector<8x24xf32> to vector<8x8xf32>
    %44 = arith.truncf %43 : vector<8x8xf32> to vector<8x8xbf16>
    %cst_15 = arith.constant dense<0.000000e+00> : vector<8x8xf32>
    %45 = tpu.matmul %42, %44, %cst_15 {dimension_numbers = #tpu.dot_dimension_numbers<[1], [1], [0], [0], [0, 0, 1, 0], [], []>} : vector<8x8xbf16>, vector<8x8xbf16>, vector<8x8xf32> -> vector<8x8xf32>
    %c24 = arith.constant 24 : index
    %c0_16 = arith.constant 0 : index
    %46 = vector.load %arg8[%c24, %c0_16] : memref<64x8xf32, #tpu.memory_space<vmem>>, vector<8x8xf32>
    tpu.vector_store %arg8[%c24, %c0_16], %45 {strides = array<i32>} : memref<64x8xf32, #tpu.memory_space<vmem>>, vector<8x8xf32>,
    %47 = vector.extract_strided_slice %18 {offsets = [8, 0], sizes = [8, 24], strides = [1, 1]} : vector<16x96xf32> to vector<8x24xf32>
    %48 = vector.extract_strided_slice %47 {offsets = [0, 0], sizes = [8, 8], strides = [1, 1]} : vector<8x24xf32> to vector<8x8xf32>
    %49 = arith.truncf %48 : vector<8x8xf32> to vector<8x8xbf16>
    %50 = vector.extract_strided_slice %47 {offsets = [0, 8], sizes = [8, 8], strides = [1, 1]} : vector<8x24xf32> to vector<8x8xf32>
    %51 = arith.truncf %50 : vector<8x8xf32> to vector<8x8xbf16>
    %cst_17 = arith.constant dense<0.000000e+00> : vector<8x8xf32>
    %52 = tpu.matmul %49, %51, %cst_17 {dimension_numbers = #tpu.dot_dimension_numbers<[1], [1], [0], [0], [0, 0, 1, 0], [], []>} : vector<8x8xbf16>, vector<8x8xbf16>, vector<8x8xf32> -> vector<8x8xf32>
    %c32 = arith.constant 32 : index
    %c0_18 = arith.constant 0 : index
    %53 = vector.load %arg8[%c32, %c0_18] : memref<64x8xf32, #tpu.memory_space<vmem>>, vector<8x8xf32>
    tpu.vector_store %arg8[%c32, %c0_18], %52 {strides = array<i32>} : memref<64x8xf32, #tpu.memory_space<vmem>>, vector<8x8xf32>,
    %54 = vector.extract_strided_slice %18 {offsets = [8, 24], sizes = [8, 24], strides = [1, 1]} : vector<16x96xf32> to vector<8x24xf32>
    %55 = vector.extract_strided_slice %54 {offsets = [0, 0], sizes = [8, 8], strides = [1, 1]} : vector<8x24xf32> to vector<8x8xf32>
    %56 = arith.truncf %55 : vector<8x8xf32> to vector<8x8xbf16>
    %57 = vector.extract_strided_slice %54 {offsets = [0, 8], sizes = [8, 8], strides = [1, 1]} : vector<8x24xf32> to vector<8x8xf32>
    %58 = arith.truncf %57 : vector<8x8xf32> to vector<8x8xbf16>
    %cst_19 = arith.constant dense<0.000000e+00> : vector<8x8xf32>
    %59 = tpu.matmul %56, %58, %cst_19 {dimension_numbers = #tpu.dot_dimension_numbers<[1], [1], [0], [0], [0, 0, 1, 0], [], []>} : vector<8x8xbf16>, vector<8x8xbf16>, vector<8x8xf32> -> vector<8x8xf32>
    %c40 = arith.constant 40 : index
    %c0_20 = arith.constant 0 : index
    %60 = vector.load %arg8[%c40, %c0_20] : memref<64x8xf32, #tpu.memory_space<vmem>>, vector<8x8xf32>
    tpu.vector_store %arg8[%c40, %c0_20], %59 {strides = array<i32>} : memref<64x8xf32, #tpu.memory_space<vmem>>, vector<8x8xf32>,
    %61 = vector.extract_strided_slice %18 {offsets = [8, 48], sizes = [8, 24], strides = [1, 1]} : vector<16x96xf32> to vector<8x24xf32>
    %62 = vector.extract_strided_slice %61 {offsets = [0, 0], sizes = [8, 8], strides = [1, 1]} : vector<8x24xf32> to vector<8x8xf32>
    %63 = arith.truncf %62 : vector<8x8xf32> to vector<8x8xbf16>
    %64 = vector.extract_strided_slice %61 {offsets = [0, 8], sizes = [8, 8], strides = [1, 1]} : vector<8x24xf32> to vector<8x8xf32>
    %65 = arith.truncf %64 : vector<8x8xf32> to vector<8x8xbf16>
    %cst_21 = arith.constant dense<0.000000e+00> : vector<8x8xf32>
    %66 = tpu.matmul %63, %65, %cst_21 {dimension_numbers = #tpu.dot_dimension_numbers<[1], [1], [0], [0], [0, 0, 1, 0], [], []>} : vector<8x8xbf16>, vector<8x8xbf16>, vector<8x8xf32> -> vector<8x8xf32>
    %c48 = arith.constant 48 : index
    %c0_22 = arith.constant 0 : index
    %67 = vector.load %arg8[%c48, %c0_22] : memref<64x8xf32, #tpu.memory_space<vmem>>, vector<8x8xf32>
    tpu.vector_store %arg8[%c48, %c0_22], %66 {strides = array<i32>} : memref<64x8xf32, #tpu.memory_space<vmem>>, vector<8x8xf32>,
    %68 = vector.extract_strided_slice %18 {offsets = [8, 72], sizes = [8, 24], strides = [1, 1]} : vector<16x96xf32> to vector<8x24xf32>
    %69 = vector.extract_strided_slice %68 {offsets = [0, 0], sizes = [8, 8], strides = [1, 1]} : vector<8x24xf32> to vector<8x8xf32>
    %70 = arith.truncf %69 : vector<8x8xf32> to vector<8x8xbf16>
    %71 = vector.extract_strided_slice %68 {offsets = [0, 8], sizes = [8, 8], strides = [1, 1]} : vector<8x24xf32> to vector<8x8xf32>
    %72 = arith.truncf %71 : vector<8x8xf32> to vector<8x8xbf16>
    %cst_23 = arith.constant dense<0.000000e+00> : vector<8x8xf32>
    %73 = tpu.matmul %70, %72, %cst_23 {dimension_numbers = #tpu.dot_dimension_numbers<[1], [1], [0], [0], [0, 0, 1, 0], [], []>} : vector<8x8xbf16>, vector<8x8xbf16>, vector<8x8xf32> -> vector<8x8xf32>
    %c56 = arith.constant 56 : index
    %c0_24 = arith.constant 0 : index
    %74 = vector.load %arg8[%c56, %c0_24] : memref<64x8xf32, #tpu.memory_space<vmem>>, vector<8x8xf32>
    tpu.vector_store %arg8[%c56, %c0_24], %73 {strides = array<i32>} : memref<64x8xf32, #tpu.memory_space<vmem>>, vector<8x8xf32>,
    %c0_25 = arith.constant 0 : index
    %c0_26 = arith.constant 0 : index
    %75 = vector.load %arg8[%c0_25, %c0_26] : memref<64x8xf32, #tpu.memory_space<vmem>>, vector<64x8xf32>
    %c0_27 = arith.constant 0 : index
    %c0_28 = arith.constant 0 : index
    %76 = vector.load %arg6[%c0_27, %c0_28] : memref<64x8xf32, #tpu.memory_space<vmem>>, vector<64x8xf32>
    %77 = arith.addf %75, %76 : vector<64x8xf32>
    %cst_29 = arith.constant dense<0xFF800000> : vector<64xf32>
    %78 = vector.multi_reduction <maximumf>, %77, %cst_29 [1] : vector<64x8xf32> to vector<64xf32>
    %79 = vector.shape_cast %78 : vector<64xf32> to vector<64x1xf32>
    %80 = vector.broadcast %79 : vector<64x1xf32> to vector<64x8xf32>
    %81 = arith.subf %77, %80 : vector<64x8xf32>
    %82 = math.exp %81 : vector<64x8xf32>
    %cst_30 = arith.constant dense<0.000000e+00> : vector<64xf32>
    %83 = vector.multi_reduction <add>, %82, %cst_30 [1] : vector<64x8xf32> to vector<64xf32>
    %84 = vector.shape_cast %83 : vector<64xf32> to vector<64x1xf32>
    %85 = tpu.reciprocal %84 {approx = true} : vector<64x1xf32> -> vector<64x1xf32>
    %86 = vector.broadcast %85 : vector<64x1xf32> to vector<64x8xf32>
    %87 = arith.mulf %82, %86 : vector<64x8xf32>
    %88 = arith.truncf %87 : vector<64x8xf32> to vector<64x8xbf16>
    %89 = vector.extract_strided_slice %18 {offsets = [0, 16], sizes = [8, 8], strides = [1, 1]} : vector<16x96xf32> to vector<8x8xf32>
    %90 = arith.truncf %89 : vector<8x8xf32> to vector<8x8xbf16>
    %91 = vector.extract_strided_slice %88 {offsets = [0, 0], sizes = [8, 8], strides = [1, 1]} : vector<64x8xbf16> to vector<8x8xbf16>
    %cst_31 = arith.constant dense<0.000000e+00> : vector<8x8xf32>
    %92 = tpu.matmul %91, %90, %cst_31 {dimension_numbers = #tpu.dot_dimension_numbers<[1], [0], [0], [1], [0, 0, 1, 1], [], []>} : vector<8x8xbf16>, vector<8x8xbf16>, vector<8x8xf32> -> vector<8x8xf32>
    %c0_32 = arith.constant 0 : index
    %c0_33 = arith.constant 0 : index
    %93 = vector.load %arg9[%c0_32, %c0_33] : memref<16x32xf32, #tpu.memory_space<vmem>>, vector<8x8xf32>
    tpu.vector_store %arg9[%c0_32, %c0_33], %92 {strides = array<i32>} : memref<16x32xf32, #tpu.memory_space<vmem>>, vector<8x8xf32>,
    %94 = vector.extract_strided_slice %18 {offsets = [0, 40], sizes = [8, 8], strides = [1, 1]} : vector<16x96xf32> to vector<8x8xf32>
    %95 = arith.truncf %94 : vector<8x8xf32> to vector<8x8xbf16>
    %96 = vector.extract_strided_slice %88 {offsets = [8, 0], sizes = [8, 8], strides = [1, 1]} : vector<64x8xbf16> to vector<8x8xbf16>
    %cst_34 = arith.constant dense<0.000000e+00> : vector<8x8xf32>
    %97 = tpu.matmul %96, %95, %cst_34 {dimension_numbers = #tpu.dot_dimension_numbers<[1], [0], [0], [1], [0, 0, 1, 1], [], []>} : vector<8x8xbf16>, vector<8x8xbf16>, vector<8x8xf32> -> vector<8x8xf32>
    %c0_35 = arith.constant 0 : index
    %c8_36 = arith.constant 8 : index
    %98 = vector.load %arg9[%c0_35, %c8_36] : memref<16x32xf32, #tpu.memory_space<vmem>>, vector<8x8xf32>
    tpu.vector_store %arg9[%c0_35, %c8_36], %97 {strides = array<i32>} : memref<16x32xf32, #tpu.memory_space<vmem>>, vector<8x8xf32>,
    %99 = vector.extract_strided_slice %18 {offsets = [0, 64], sizes = [8, 8], strides = [1, 1]} : vector<16x96xf32> to vector<8x8xf32>
    %100 = arith.truncf %99 : vector<8x8xf32> to vector<8x8xbf16>
    %101 = vector.extract_strided_slice %88 {offsets = [16, 0], sizes = [8, 8], strides = [1, 1]} : vector<64x8xbf16> to vector<8x8xbf16>
    %cst_37 = arith.constant dense<0.000000e+00> : vector<8x8xf32>
    %102 = tpu.matmul %101, %100, %cst_37 {dimension_numbers = #tpu.dot_dimension_numbers<[1], [0], [0], [1], [0, 0, 1, 1], [], []>} : vector<8x8xbf16>, vector<8x8xbf16>, vector<8x8xf32> -> vector<8x8xf32>
    %c0_38 = arith.constant 0 : index
    %c16_39 = arith.constant 16 : index
    %103 = vector.load %arg9[%c0_38, %c16_39] : memref<16x32xf32, #tpu.memory_space<vmem>>, vector<8x8xf32>
    tpu.vector_store %arg9[%c0_38, %c16_39], %102 {strides = array<i32>} : memref<16x32xf32, #tpu.memory_space<vmem>>, vector<8x8xf32>,
    %104 = vector.extract_strided_slice %18 {offsets = [0, 88], sizes = [8, 8], strides = [1, 1]} : vector<16x96xf32> to vector<8x8xf32>
    %105 = arith.truncf %104 : vector<8x8xf32> to vector<8x8xbf16>
    %106 = vector.extract_strided_slice %88 {offsets = [24, 0], sizes = [8, 8], strides = [1, 1]} : vector<64x8xbf16> to vector<8x8xbf16>
    %cst_40 = arith.constant dense<0.000000e+00> : vector<8x8xf32>
    %107 = tpu.matmul %106, %105, %cst_40 {dimension_numbers = #tpu.dot_dimension_numbers<[1], [0], [0], [1], [0, 0, 1, 1], [], []>} : vector<8x8xbf16>, vector<8x8xbf16>, vector<8x8xf32> -> vector<8x8xf32>
    %c0_41 = arith.constant 0 : index
    %c24_42 = arith.constant 24 : index
    %108 = vector.load %arg9[%c0_41, %c24_42] : memref<16x32xf32, #tpu.memory_space<vmem>>, vector<8x8xf32>
    tpu.vector_store %arg9[%c0_41, %c24_42], %107 {strides = array<i32>} : memref<16x32xf32, #tpu.memory_space<vmem>>, vector<8x8xf32>,
    %109 = vector.extract_strided_slice %18 {offsets = [8, 16], sizes = [8, 8], strides = [1, 1]} : vector<16x96xf32> to vector<8x8xf32>
    %110 = arith.truncf %109 : vector<8x8xf32> to vector<8x8xbf16>
    %111 = vector.extract_strided_slice %88 {offsets = [32, 0], sizes = [8, 8], strides = [1, 1]} : vector<64x8xbf16> to vector<8x8xbf16>
    %cst_43 = arith.constant dense<0.000000e+00> : vector<8x8xf32>
    %112 = tpu.matmul %111, %110, %cst_43 {dimension_numbers = #tpu.dot_dimension_numbers<[1], [0], [0], [1], [0, 0, 1, 1], [], []>} : vector<8x8xbf16>, vector<8x8xbf16>, vector<8x8xf32> -> vector<8x8xf32>
    %c8_44 = arith.constant 8 : index
    %c0_45 = arith.constant 0 : index
    %113 = vector.load %arg9[%c8_44, %c0_45] : memref<16x32xf32, #tpu.memory_space<vmem>>, vector<8x8xf32>
    tpu.vector_store %arg9[%c8_44, %c0_45], %112 {strides = array<i32>} : memref<16x32xf32, #tpu.memory_space<vmem>>, vector<8x8xf32>,
    %114 = vector.extract_strided_slice %18 {offsets = [8, 40], sizes = [8, 8], strides = [1, 1]} : vector<16x96xf32> to vector<8x8xf32>
    %115 = arith.truncf %114 : vector<8x8xf32> to vector<8x8xbf16>
    %116 = vector.extract_strided_slice %88 {offsets = [40, 0], sizes = [8, 8], strides = [1, 1]} : vector<64x8xbf16> to vector<8x8xbf16>
    %cst_46 = arith.constant dense<0.000000e+00> : vector<8x8xf32>
    %117 = tpu.matmul %116, %115, %cst_46 {dimension_numbers = #tpu.dot_dimension_numbers<[1], [0], [0], [1], [0, 0, 1, 1], [], []>} : vector<8x8xbf16>, vector<8x8xbf16>, vector<8x8xf32> -> vector<8x8xf32>
    %c8_47 = arith.constant 8 : index
    %c8_48 = arith.constant 8 : index
    %118 = vector.load %arg9[%c8_47, %c8_48] : memref<16x32xf32, #tpu.memory_space<vmem>>, vector<8x8xf32>
    tpu.vector_store %arg9[%c8_47, %c8_48], %117 {strides = array<i32>} : memref<16x32xf32, #tpu.memory_space<vmem>>, vector<8x8xf32>,
    %119 = vector.extract_strided_slice %18 {offsets = [8, 64], sizes = [8, 8], strides = [1, 1]} : vector<16x96xf32> to vector<8x8xf32>
    %120 = arith.truncf %119 : vector<8x8xf32> to vector<8x8xbf16>
    %121 = vector.extract_strided_slice %88 {offsets = [48, 0], sizes = [8, 8], strides = [1, 1]} : vector<64x8xbf16> to vector<8x8xbf16>
    %cst_49 = arith.constant dense<0.000000e+00> : vector<8x8xf32>
    %122 = tpu.matmul %121, %120, %cst_49 {dimension_numbers = #tpu.dot_dimension_numbers<[1], [0], [0], [1], [0, 0, 1, 1], [], []>} : vector<8x8xbf16>, vector<8x8xbf16>, vector<8x8xf32> -> vector<8x8xf32>
    %c8_50 = arith.constant 8 : index
    %c16_51 = arith.constant 16 : index
    %123 = vector.load %arg9[%c8_50, %c16_51] : memref<16x32xf32, #tpu.memory_space<vmem>>, vector<8x8xf32>
    tpu.vector_store %arg9[%c8_50, %c16_51], %122 {strides = array<i32>} : memref<16x32xf32, #tpu.memory_space<vmem>>, vector<8x8xf32>,
    %124 = vector.extract_strided_slice %18 {offsets = [8, 88], sizes = [8, 8], strides = [1, 1]} : vector<16x96xf32> to vector<8x8xf32>
    %125 = arith.truncf %124 : vector<8x8xf32> to vector<8x8xbf16>
    %126 = vector.extract_strided_slice %88 {offsets = [56, 0], sizes = [8, 8], strides = [1, 1]} : vector<64x8xbf16> to vector<8x8xbf16>
    %cst_52 = arith.constant dense<0.000000e+00> : vector<8x8xf32>
    %127 = tpu.matmul %126, %125, %cst_52 {dimension_numbers = #tpu.dot_dimension_numbers<[1], [0], [0], [1], [0, 0, 1, 1], [], []>} : vector<8x8xbf16>, vector<8x8xbf16>, vector<8x8xf32> -> vector<8x8xf32>
    %c8_53 = arith.constant 8 : index
    %c24_54 = arith.constant 24 : index
    %128 = vector.load %arg9[%c8_53, %c24_54] : memref<16x32xf32, #tpu.memory_space<vmem>>, vector<8x8xf32>
    tpu.vector_store %arg9[%c8_53, %c24_54], %127 {strides = array<i32>} : memref<16x32xf32, #tpu.memory_space<vmem>>, vector<8x8xf32>,
    %c0_55 = arith.constant 0 : index
    %c0_56 = arith.constant 0 : index
    %129 = vector.load %arg9[%c0_55, %c0_56] : memref<16x32xf32, #tpu.memory_space<vmem>>, vector<16x32xf32>
    %130 = arith.truncf %129 : vector<16x32xf32> to vector<16x32xbf16>
    %c0_57 = arith.constant 0 : index
    %c0_58 = arith.constant 0 : index
    %131 = vector.load %arg3[%c0_57, %c0_58] : memref<32x32xbf16, #tpu.memory_space<vmem>>, vector<32x32xbf16>
    %cst_59 = arith.constant dense<0.000000e+00> : vector<16x32xf32>
    %132 = tpu.matmul %130, %131, %cst_59 {dimension_numbers = #tpu.dot_dimension_numbers<[1], [0], [0], [1], [0, 0, 1, 1], [], []>} : vector<16x32xbf16>, vector<32x32xbf16>, vector<16x32xf32> -> vector<16x32xf32>
    %133 = arith.addf %0, %132 : vector<16x32xf32>
    %134 = arith.mulf %133, %133 : vector<16x32xf32>
    %cst_60 = arith.constant dense<0.000000e+00> : vector<16xf32>
    %135 = vector.multi_reduction <add>, %134, %cst_60 [1] : vector<16x32xf32> to vector<16xf32>
    %136 = vector.shape_cast %135 : vector<16xf32> to vector<16x1xf32>
    %cst_61 = arith.constant 3.200000e+01 : f32
    %137 = vector.broadcast %cst_61 : f32 to vector<16x1xf32>
    %138 = arith.divf %136, %137 : vector<16x1xf32>
    %cst_62 = arith.constant 9.99999997E-7 : f32
    %139 = vector.broadcast %cst_62 : f32 to vector<16x1xf32>
    %140 = arith.addf %138, %139 : vector<16x1xf32>
    %141 = math.rsqrt %140 : vector<16x1xf32>
    %142 = vector.broadcast %141 : vector<16x1xf32> to vector<16x32xf32>
    %143 = arith.mulf %133, %142 : vector<16x32xf32>
    %144 = vector.broadcast %3 : vector<1x32xf32> to vector<16x32xf32>
    %145 = arith.mulf %143, %144 : vector<16x32xf32>
    %146 = arith.truncf %145 : vector<16x32xf32> to vector<16x32xbf16>
    %c0_63 = arith.constant 0 : index
    %c0_64 = arith.constant 0 : index
    %147 = vector.load %arg4[%c0_63, %c0_64] : memref<32x64xbf16, #tpu.memory_space<vmem>>, vector<32x64xbf16>
    %cst_65 = arith.constant dense<0.000000e+00> : vector<16x64xf32>
    %148 = tpu.matmul %146, %147, %cst_65 {dimension_numbers = #tpu.dot_dimension_numbers<[1], [0], [0], [1], [0, 0, 1, 1], [], []>} : vector<16x32xbf16>, vector<32x64xbf16>, vector<16x64xf32> -> vector<16x64xf32>
    %cst_66 = arith.constant 0.000000e+00 : f32
    %149 = vector.broadcast %cst_66 : f32 to vector<16x64xf32>
    %150 = arith.maximumf %148, %149 : vector<16x64xf32>
    %151 = arith.truncf %150 : vector<16x64xf32> to vector<16x64xbf16>
    %c0_67 = arith.constant 0 : index
    %c0_68 = arith.constant 0 : index
    %152 = vector.load %arg5[%c0_67, %c0_68] : memref<64x32xbf16, #tpu.memory_space<vmem>>, vector<64x32xbf16>
    %cst_69 = arith.constant dense<0.000000e+00> : vector<16x32xf32>
    %153 = tpu.matmul %151, %152, %cst_69 {dimension_numbers = #tpu.dot_dimension_numbers<[1], [0], [0], [1], [0, 0, 1, 1], [], []>} : vector<16x64xbf16>, vector<64x32xbf16>, vector<16x32xf32> -> vector<16x32xf32>
    %154 = arith.addf %133, %153 : vector<16x32xf32>
    %c0_70 = arith.constant 0 : index
    %c0_71 = arith.constant 0 : index
    %155 = vector.load %arg7[%c0_70, %c0_71] : memref<16x32xf32, #tpu.memory_space<vmem>>, vector<16x32xf32>
    tpu.vector_store %arg7[%c0_70, %c0_71], %154 {strides = array<i32>} : memref<16x32xf32, #tpu.memory_space<vmem>>, vector<16x32xf32>,
    return
  }
}

</mosaic_0001>

<llo_original>
// kernel: tpu_custom_call.1
$region0: #{tpu_custom_call.1}
  #allocation0 [shape = 'u32[]', space=smem, size = 0x4, offset = 0x4, fixed_abs, tag = 'smem constant byte address 0x4 - core index']
  #allocation1 [shape = 'u32[144,128]{1,0:T(1,128)}', space=vmem, size = 0x12000, scoped, tag = 'internal scratch']
  #allocation2 [shape = 'f32[64,8]{1,0:T(8,128)}', space=vmem, size = 0x8000, scoped, tag = 'scratch operand']
  #allocation3 [shape = 'f32[16,32]{1,0:T(8,128)}', space=vmem, size = 0x2000, scoped, tag = 'scratch operand']
  %s0 = inlined_call_operand.vmem [shape: f32[16,32], index: 0, kind: input, shape index: {}]
  %s1 = inlined_call_operand.vmem [shape: f32[2,32], index: 1, kind: input, shape index: {}]
  %s2 = inlined_call_operand.vmem [shape: bf16[32,96], index: 2, kind: input, shape index: {}]
  %s3 = inlined_call_operand.vmem [shape: bf16[32,32], index: 3, kind: input, shape index: {}]
  %s4 = inlined_call_operand.vmem [shape: bf16[32,64], index: 4, kind: input, shape index: {}]
  %s5 = inlined_call_operand.vmem [shape: bf16[64,32], index: 5, kind: input, shape index: {}]
  %s6 = inlined_call_operand.vmem [shape: f32[64,8], index: 6, kind: input, shape index: {}]
  %s7 = inlined_call_operand.hbm [shape: f32[16,32], index: 7, kind: output, shape index: {}]
  %s8 = sld [smem:[#allocation0]]
  $region38: #{tpu_custom_call.1} parent=0
    _
  %s10 = ssub.s32 1, %s8
  %s11 = scalar_select 0, %s10, %s8
  $region1: #{tpu_custom_call.1} parent=0
    #allocation4 [shape = 'u8[8192]{0}', space=vmem, size = 0x2000, scoped, tag = 'output window, operand 0, single buffered']
    #allocation5 [shape = 's32[1]{0}', space=sflag, size = 0x4, scoped, tag = 'scoped memory for tpu_custom_call.1']
    %12 = vsyncpa [#allocation5], 0
    // Predicated region
    $region2: #{tpu_custom_call.1} parent=1 // pred_check
      _
    $region3: #{tpu_custom_call.1} parent=1 // pred_check_branch
      %14 = sbr.rel (0) target = $region5
    $region4: #{tpu_custom_call.1} parent=1 // pred_region
      _
    $region5: #{tpu_custom_call.1} parent=1 // pred_fallthru
      _
    // Predicated region
    $region6: #{tpu_custom_call.1} parent=1 // pred_check
      _
    $region7: #{tpu_custom_call.1} parent=1 // pred_check_branch
      %16 = sbr.rel (0) target = $region9
    $region8: #{tpu_custom_call.1} parent=1 // pred_region
      _
    $region9: #{tpu_custom_call.1} parent=1 // pred_fallthru
      _
    // Predicated region
    $region10: #{tpu_custom_call.1} parent=1 // pred_check
      _
    $region11: #{tpu_custom_call.1} parent=1 // pred_check_branch
      %18 = sbr.rel (0) target = $region13
    $region12: #{tpu_custom_call.1} parent=1 // pred_region
      _
    $region13: #{tpu_custom_call.1} parent=1 // pred_fallthru
      _
    // Predicated region
    $region14: #{tpu_custom_call.1} parent=1 // pred_check
      _
    $region15: #{tpu_custom_call.1} parent=1 // pred_check_branch
      %20 = sbr.rel (0) target = $region17
    $region16: #{tpu_custom_call.1} parent=1 // pred_region
      _
    $region17: #{tpu_custom_call.1} parent=1 // pred_fallthru
      _
    // Predicated region
    $region18: #{tpu_custom_call.1} parent=1 // pred_check
      _
    $region19: #{tpu_custom_call.1} parent=1 // pred_check_branch
      %22 = sbr.rel (0) target = $region21
    $region20: #{tpu_custom_call.1} parent=1 // pred_region
      _
    $region21: #{tpu_custom_call.1} parent=1 // pred_fallthru
      _
    // Predicated region
    $region22: #{tpu_custom_call.1} parent=1 // pred_check
      _
    $region23: #{tpu_custom_call.1} parent=1 // pred_check_branch
      %24 = sbr.rel (0) target = $region25
    $region24: #{tpu_custom_call.1} parent=1 // pred_region
      _
    $region25: #{tpu_custom_call.1} parent=1 // pred_fallthru
      _
    // Predicated region
    $region26: #{tpu_custom_call.1} parent=1 // pred_check
      _
    $region27: #{tpu_custom_call.1} parent=1 // pred_check_branch
      %26 = sbr.rel (0) target = $region29
    $region28: #{tpu_custom_call.1} parent=1 // pred_region
      _
    $region29: #{tpu_custom_call.1} parent=1 // pred_fallthru
      _
    %v28 = vld [vmem:[%s0] sm:$0xff]
    %v29 = vld [vmem:[%s0 + $0x8] sm:$0xff]
    %v30 = vld [vmem:[%s1] sm:$0x3]
    %v31 = vmul.f32 %v28, %v28
    %v32 = vmul.f32 %v29, %v29
    %vm33 = vcmask 261120
    %v34 = vsel %vm33, %v31, 0.0
    %35 = vadd.xlane.f32.xlu0 %v34
    %v36 = vpop.xlane.xlu0 %35
    %v37 = vsel %vm33, %v32, 0.0
    %38 = vadd.xlane.f32.xlu0 %v37
    %v39 = vpop.xlane.xlu0 %38
    %v40 = vrcp.pop 32.0
    %v41 = vmul.f32 %v36, %v40
    %v42 = vmul.f32 %v39, %v40
    %v43 = vadd.f32 %v41, 1e-06
    %v44 = vadd.f32 %v42, 1e-06
    %v45 = vrsqrt.pop %v43
    %v46 = vrsqrt.pop %v44
    %v47 = vmul.f32 %v28, %v45
    %v48 = vmul.f32 %v29, %v46
    %v49 = vlaneseq
    %v50 = vshrl.u32 %v49, 7
    %v51 = vsub.s32 0, %v50
    %v52 = vrot.slane %v30, %v51
    %v53 = vmul.f32 %v47, %v52
    %v54 = vmul.f32 %v48, %v52
    %v55 = vpack.c.bf16 %v54, %v53
    %v56 = vld [vmem:[%s2] sm:$0xf]
    %v57 = vld [vmem:[%s2 + $0x4] sm:$0xf]
    %v58 = vld [vmem:[%s2 + $0x8] sm:$0xf]
    %v59 = vld [vmem:[%s2 + $0xc] sm:$0xf]
    %v64 = vunpack.c.l.b16 %v56
    %v65 = vunpack.c.l.b16 %v57
    %v66 = vunpack.c.l.b16 %v58
    %v67 = vunpack.c.l.b16 %v59
    %v68 = vpack.c.b16 %v65, %v64
    %v69 = vpack.c.b16 %v67, %v66
    %v73 = vsel %vm33, %v55, 0
    %75 = vmatprep.subr.bf16.mxu0 0
    %76 = vmatpush1.bf16.msra.mxu0 %v68
    %77 = vmatprep.subr.bf16.mxu0 0
    %78 = vmatpush1.bf16.msra.mxu0 %v69
    %79 = vmatprep.subr.bf16.mxu0 0
    %80 = vmatpush1.bf16.msra.mxu0 0
    %81 = vmatprep.subr.bf16.mxu0 0
    %82 = vmatpush1.bf16.msra.mxu0 0
    %83 = vmatprep.subr.bf16.mxu0 0
    %84 = vmatpush1.bf16.msra.mxu0 0
    %85 = vmatprep.subr.bf16.mxu0 0
    %86 = vmatpush1.bf16.msra.mxu0 0
    %87 = vmatprep.subr.bf16.mxu0 0
    %88 = vmatpush1.bf16.msra.mxu0 0
    %89 = vmatprep.subr.bf16.mxu0 0
    %90 = vmatpush1.bf16.msra.mxu0 0
    %91 = vmatprep.subr.bf16.mxu0 0
    %92 = vmatpush1.bf16.msra.mxu0 0
    %93 = vmatprep.subr.bf16.mxu0 0
    %94 = vmatpush1.bf16.msra.mxu0 0
    %95 = vmatprep.subr.bf16.mxu0 0
    %96 = vmatpush1.bf16.msra.mxu0 0
    %97 = vmatprep.subr.bf16.mxu0 0
    %98 = vmatpush1.bf16.msra.mxu0 0
    %99 = vmatprep.subr.bf16.mxu0 0
    %100 = vmatpush1.bf16.msra.mxu0 0
    %101 = vmatprep.subr.bf16.mxu0 0
    %102 = vmatpush1.bf16.msra.mxu0 0
    %103 = vmatprep.subr.bf16.mxu0 0
    %104 = vmatpush1.bf16.msra.mxu0 0
    %105 = vmatprep.subr.bf16.mxu0 0
    %106 = vmatpush1.bf16.msra.mxu0 0
    %107 = vmatprep.mubr.bf16.mxu0 0
    %108 = vmatmul.mubr.bf16.gmra.mrb[0].mxu0 %v73
    %v109 = vpop.f32.mrb[0].mxu0
    %v110 = vadd.f32 0.0, %v109
    %v111 = vpop.f32.mrb[0].mxu0
    %v112 = vpop.f32.mrb[0].mxu0
    %v113 = vadd.f32 0.0, %v112
    %v114 = vpop.f32.mrb[0].mxu0
    %115 = vdwg.mxu0
    %v116 = vpack.c.bf16 %v110, %v110
    %118 = vrot.lane.b32.xlu0 %v116, 120
    %v119 = vpop.permute.xlu0 %118
    %vm120 = vcmask 64512
    %v122 = vsel %vm120, %v116, 0
    %v125 = vsel %vm120, %v119, 0
    %127 = vmatprep.subr.bf16.mxu0 0
    %128 = vmatpush1.bf16.xpose.msra.mxu0 %v125
    %129 = vmatprep.subr.bf16.mxu0 0
    %130 = vmatpush1.bf16.xpose.msra.mxu0 0
    %131 = vmatprep.subr.bf16.mxu0 0
    %132 = vmatpush1.bf16.xpose.msra.mxu0 0
    %133 = vmatprep.subr.bf16.mxu0 0
    %134 = vmatpush1.bf16.xpose.msra.mxu0 0
    %135 = vmatprep.subr.bf16.mxu0 0
    %136 = vmatpush1.bf16.xpose.msra.mxu0 0
    %137 = vmatprep.subr.bf16.mxu0 0
    %138 = vmatpush1.bf16.xpose.msra.mxu0 0
    %139 = vmatprep.subr.bf16.mxu0 0
    %140 = vmatpush1.bf16.xpose.msra.mxu0 0
    %141 = vmatprep.subr.bf16.mxu0 0
    %142 = vmatpush1.bf16.xpose.msra.mxu0 0
    %143 = vmatprep.subr.bf16.mxu0 0
    %144 = vmatpush1.bf16.xpose.msra.mxu0 0
    %145 = vmatprep.subr.bf16.mxu0 0
    %146 = vmatpush1.bf16.xpose.msra.mxu0 0
    %147 = vmatprep.subr.bf16.mxu0 0
    %148 = vmatpush1.bf16.xpose.msra.mxu0 0
    %149 = vmatprep.subr.bf16.mxu0 0
    %150 = vmatpush1.bf16.xpose.msra.mxu0 0
    %151 = vmatprep.subr.bf16.mxu0 0
    %152 = vmatpush1.bf16.xpose.msra.mxu0 0
    %153 = vmatprep.subr.bf16.mxu0 0
    %154 = vmatpush1.bf16.xpose.msra.mxu0 0
    %155 = vmatprep.subr.bf16.mxu0 0
    %156 = vmatpush1.bf16.xpose.msra.mxu0 0
    %157 = vmatprep.subr.bf16.mxu0 0
    %158 = vmatpush1.bf16.xpose.msra.mxu0 0
    %159 = vmatprep.mubr.bf16.mxu0 0
    %160 = vmatmul.mubr.bf16.gmra.mrb[0].mxu0 %v122
    %v161 = vpop.f32.mrb[0].mxu0
    %v162 = vadd.f32 0.0, %v161
    %v163 = vpop.f32.mrb[0].mxu0
    %v164 = vpop.f32.mrb[0].mxu0
    %v165 = vpop.f32.mrb[0].mxu0
    %166 = vdwg.mxu0
    %167 = vst.msk [vmem:[#allocation2] sm:$0xff] %vm120, %v162
    %168 = vrot.lane.b32.xlu0 %v116, 104
    %v169 = vpop.permute.xlu0 %168
    %170 = vrot.lane.b32.xlu0 %v116, 96
    %v171 = vpop.permute.xlu0 %170
    %v173 = vsel %vm120, %v169, 0
    %v176 = vsel %vm120, %v171, 0
    %178 = vmatprep.subr.bf16.mxu0 0
    %179 = vmatpush1.bf16.xpose.msra.mxu0 %v176
    %180 = vmatprep.subr.bf16.mxu0 0
    %181 = vmatpush1.bf16.xpose.msra.mxu0 0
    %182 = vmatprep.subr.bf16.mxu0 0
    %183 = vmatpush1.bf16.xpose.msra.mxu0 0
    %184 = vmatprep.subr.bf16.mxu0 0
    %185 = vmatpush1.bf16.xpose.msra.mxu0 0
    %186 = vmatprep.subr.bf16.mxu0 0
    %187 = vmatpush1.bf16.xpose.msra.mxu0 0
    %188 = vmatprep.subr.bf16.mxu0 0
    %189 = vmatpush1.bf16.xpose.msra.mxu0 0
    %190 = vmatprep.subr.bf16.mxu0 0
    %191 = vmatpush1.bf16.xpose.msra.mxu0 0
    %192 = vmatprep.subr.bf16.mxu0 0
    %193 = vmatpush1.bf16.xpose.msra.mxu0 0
    %194 = vmatprep.subr.bf16.mxu0 0
    %195 = vmatpush1.bf16.xpose.msra.mxu0 0
    %196 = vmatprep.subr.bf16.mxu0 0
    %197 = vmatpush1.bf16.xpose.msra.mxu0 0
    %198 = vmatprep.subr.bf16.mxu0 0
    %199 = vmatpush1.bf16.xpose.msra.mxu0 0
    %200 = vmatprep.subr.bf16.mxu0 0
    %201 = vmatpush1.bf16.xpose.msra.mxu0 0
    %202 = vmatprep.subr.bf16.mxu0 0
    %203 = vmatpush1.bf16.xpose.msra.mxu0 0
    %204 = vmatprep.subr.bf16.mxu0 0
    %205 = vmatpush1.bf16.xpose.msra.mxu0 0
    %206 = vmatprep.subr.bf16.mxu0 0
    %207 = vmatpush1.bf16.xpose.msra.mxu0 0
    %208 = vmatprep.subr.bf16.mxu0 0
    %209 = vmatpush1.bf16.xpose.msra.mxu0 0
    %210 = vmatprep.mubr.bf16.mxu0 0
    %211 = vmatmul.mubr.bf16.gmra.mrb[0].mxu0 %v173
    %v212 = vpop.f32.mrb[0].mxu0
    %v213 = vadd.f32 0.0, %v212
    %v214 = vpop.f32.mrb[0].mxu0
    %v215 = vpop.f32.mrb[0].mxu0
    %v216 = vpop.f32.mrb[0].mxu0
    %217 = vdwg.mxu0
    %218 = vst.msk [vmem:[#allocation2 + $0x8] sm:$0xff] %vm120, %v213
    %219 = vrot.lane.b32.xlu0 %v116, 80
    %v220 = vpop.permute.xlu0 %219
    %221 = vrot.lane.b32.xlu0 %v116, 72
    %v222 = vpop.permute.xlu0 %221
    %v224 = vsel %vm120, %v220, 0
    %v227 = vsel %vm120, %v222, 0
    %229 = vmatprep.subr.bf16.mxu0 0
    %230 = vmatpush1.bf16.xpose.msra.mxu0 %v227
    %231 = vmatprep.subr.bf16.mxu0 0
    %232 = vmatpush1.bf16.xpose.msra.mxu0 0
    %233 = vmatprep.subr.bf16.mxu0 0
    %234 = vmatpush1.bf16.xpose.msra.mxu0 0
    %235 = vmatprep.subr.bf16.mxu0 0
    %236 = vmatpush1.bf16.xpose.msra.mxu0 0
    %237 = vmatprep.subr.bf16.mxu0 0
    %238 = vmatpush1.bf16.xpose.msra.mxu0 0
    %239 = vmatprep.subr.bf16.mxu0 0
    %240 = vmatpush1.bf16.xpose.msra.mxu0 0
    %241 = vmatprep.subr.bf16.mxu0 0
    %242 = vmatpush1.bf16.xpose.msra.mxu0 0
    %243 = vmatprep.subr.bf16.mxu0 0
    %244 = vmatpush1.bf16.xpose.msra.mxu0 0
    %245 = vmatprep.subr.bf16.mxu0 0
    %246 = vmatpush1.bf16.xpose.msra.mxu0 0
    %247 = vmatprep.subr.bf16.mxu0 0
    %248 = vmatpush1.bf16.xpose.msra.mxu0 0
    %249 = vmatprep.subr.bf16.mxu0 0
    %250 = vmatpush1.bf16.xpose.msra.mxu0 0
    %251 = vmatprep.subr.bf16.mxu0 0
    %252 = vmatpush1.bf16.xpose.msra.mxu0 0
    %253 = vmatprep.subr.bf16.mxu0 0
    %254 = vmatpush1.bf16.xpose.msra.mxu0 0
    %255 = vmatprep.subr.bf16.mxu0 0
    %256 = vmatpush1.bf16.xpose.msra.mxu0 0
    %257 = vmatprep.subr.bf16.mxu0 0
    %258 = vmatpush1.bf16.xpose.msra.mxu0 0
    %259 = vmatprep.subr.bf16.mxu0 0
    %260 = vmatpush1.bf16.xpose.msra.mxu0 0
    %261 = vmatprep.mubr.bf16.mxu0 0
    %262 = vmatmul.mubr.bf16.gmra.mrb[0].mxu0 %v224
    %v263 = vpop.f32.mrb[0].mxu0
    %v264 = vadd.f32 0.0, %v263
    %v265 = vpop.f32.mrb[0].mxu0
    %v266 = vpop.f32.mrb[0].mxu0
    %v267 = vpop.f32.mrb[0].mxu0
    %268 = vdwg.mxu0
    %269 = vst.msk [vmem:[#allocation2 + $0x10] sm:$0xff] %vm120, %v264
    %270 = vrot.lane.b32.xlu0 %v116, 56
    %v271 = vpop.permute.xlu0 %270
    %272 = vrot.lane.b32.xlu0 %v116, 48
    %v273 = vpop.permute.xlu0 %272
    %v275 = vsel %vm120, %v271, 0
    %v278 = vsel %vm120, %v273, 0
    %280 = vmatprep.subr.bf16.mxu0 0
    %281 = vmatpush1.bf16.xpose.msra.mxu0 %v278
    %282 = vmatprep.subr.bf16.mxu0 0
    %283 = vmatpush1.bf16.xpose.msra.mxu0 0
    %284 = vmatprep.subr.bf16.mxu0 0
    %285 = vmatpush1.bf16.xpose.msra.mxu0 0
    %286 = vmatprep.subr.bf16.mxu0 0
    %287 = vmatpush1.bf16.xpose.msra.mxu0 0
    %288 = vmatprep.subr.bf16.mxu0 0
    %289 = vmatpush1.bf16.xpose.msra.mxu0 0
    %290 = vmatprep.subr.bf16.mxu0 0
    %291 = vmatpush1.bf16.xpose.msra.mxu0 0
    %292 = vmatprep.subr.bf16.mxu0 0
    %293 = vmatpush1.bf16.xpose.msra.mxu0 0
    %294 = vmatprep.subr.bf16.mxu0 0
    %295 = vmatpush1.bf16.xpose.msra.mxu0 0
    %296 = vmatprep.subr.bf16.mxu0 0
    %297 = vmatpush1.bf16.xpose.msra.mxu0 0
    %298 = vmatprep.subr.bf16.mxu0 0
    %299 = vmatpush1.bf16.xpose.msra.mxu0 0
    %300 = vmatprep.subr.bf16.mxu0 0
    %301 = vmatpush1.bf16.xpose.msra.mxu0 0
    %302 = vmatprep.subr.bf16.mxu0 0
    %303 = vmatpush1.bf16.xpose.msra.mxu0 0
    %304 = vmatprep.subr.bf16.mxu0 0
    %305 = vmatpush1.bf16.xpose.msra.mxu0 0
    %306 = vmatprep.subr.bf16.mxu0 0
    %307 = vmatpush1.bf16.xpose.msra.mxu0 0
    %308 = vmatprep.subr.bf16.mxu0 0
    %309 = vmatpush1.bf16.xpose.msra.mxu0 0
    %310 = vmatprep.subr.bf16.mxu0 0
    %311 = vmatpush1.bf16.xpose.msra.mxu0 0
    %312 = vmatprep.mubr.bf16.mxu0 0
    %313 = vmatmul.mubr.bf16.gmra.mrb[0].mxu0 %v275
    %v314 = vpop.f32.mrb[0].mxu0
    %v315 = vadd.f32 0.0, %v314
    %v316 = vpop.f32.mrb[0].mxu0
    %v317 = vpop.f32.mrb[0].mxu0
    %v318 = vpop.f32.mrb[0].mxu0
    %319 = vdwg.mxu0
    %320 = vst.msk [vmem:[#allocation2 + $0x18] sm:$0xff] %vm120, %v315
    %v321 = vpack.c.bf16 %v113, %v113
    %323 = vrot.lane.b32.xlu0 %v321, 120
    %v324 = vpop.permute.xlu0 %323
    %v326 = vsel %vm120, %v321, 0
    %v329 = vsel %vm120, %v324, 0
    %331 = vmatprep.subr.bf16.mxu0 0
    %332 = vmatpush1.bf16.xpose.msra.mxu0 %v329
    %333 = vmatprep.subr.bf16.mxu0 0
    %334 = vmatpush1.bf16.xpose.msra.mxu0 0
    %335 = vmatprep.subr.bf16.mxu0 0
    %336 = vmatpush1.bf16.xpose.msra.mxu0 0
    %337 = vmatprep.subr.bf16.mxu0 0
    %338 = vmatpush1.bf16.xpose.msra.mxu0 0
    %339 = vmatprep.subr.bf16.mxu0 0
    %340 = vmatpush1.bf16.xpose.msra.mxu0 0
    %341 = vmatprep.subr.bf16.mxu0 0
    %342 = vmatpush1.bf16.xpose.msra.mxu0 0
    %343 = vmatprep.subr.bf16.mxu0 0
    %344 = vmatpush1.bf16.xpose.msra.mxu0 0
    %345 = vmatprep.subr.bf16.mxu0 0
    %346 = vmatpush1.bf16.xpose.msra.mxu0 0
    %347 = vmatprep.subr.bf16.mxu0 0
    %348 = vmatpush1.bf16.xpose.msra.mxu0 0
    %349 = vmatprep.subr.bf16.mxu0 0
    %350 = vmatpush1.bf16.xpose.msra.mxu0 0
    %351 = vmatprep.subr.bf16.mxu0 0
    %352 = vmatpush1.bf16.xpose.msra.mxu0 0
    %353 = vmatprep.subr.bf16.mxu0 0
    %354 = vmatpush1.bf16.xpose.msra.mxu0 0
    %355 = vmatprep.subr.bf16.mxu0 0
    %356 = vmatpush1.bf16.xpose.msra.mxu0 0
    %357 = vmatprep.subr.bf16.mxu0 0
    %358 = vmatpush1.bf16.xpose.msra.mxu0 0
    %359 = vmatprep.subr.bf16.mxu0 0
    %360 = vmatpush1.bf16.xpose.msra.mxu0 0
    %361 = vmatprep.subr.bf16.mxu0 0
    %362 = vmatpush1.bf16.xpose.msra.mxu0 0
    %363 = vmatprep.mubr.bf16.mxu0 0
    %364 = vmatmul.mubr.bf16.gmra.mrb[0].mxu0 %v326
    %v365 = vpop.f32.mrb[0].mxu0
    %v366 = vadd.f32 0.0, %v365
    %v367 = vpop.f32.mrb[0].mxu0
    %v368 = vpop.f32.mrb[0].mxu0
    %v369 = vpop.f32.mrb[0].mxu0
    %370 = vdwg.mxu0
    %371 = vst.msk [vmem:[#allocation2 + $0x20] sm:$0xff] %vm120, %v366
    %372 = vrot.lane.b32.xlu0 %v321, 104
    %v373 = vpop.permute.xlu0 %372
    %374 = vrot.lane.b32.xlu0 %v321, 96
    %v375 = vpop.permute.xlu0 %374
    %v377 = vsel %vm120, %v373, 0
    %v380 = vsel %vm120, %v375, 0
    %382 = vmatprep.subr.bf16.mxu0 0
    %383 = vmatpush1.bf16.xpose.msra.mxu0 %v380
    %384 = vmatprep.subr.bf16.mxu0 0
    %385 = vmatpush1.bf16.xpose.msra.mxu0 0
    %386 = vmatprep.subr.bf16.mxu0 0
    %387 = vmatpush1.bf16.xpose.msra.mxu0 0
    %388 = vmatprep.subr.bf16.mxu0 0
    %389 = vmatpush1.bf16.xpose.msra.mxu0 0
    %390 = vmatprep.subr.bf16.mxu0 0
    %391 = vmatpush1.bf16.xpose.msra.mxu0 0
    %392 = vmatprep.subr.bf16.mxu0 0
    %393 = vmatpush1.bf16.xpose.msra.mxu0 0
    %394 = vmatprep.subr.bf16.mxu0 0
    %395 = vmatpush1.bf16.xpose.msra.mxu0 0
    %396 = vmatprep.subr.bf16.mxu0 0
    %397 = vmatpush1.bf16.xpose.msra.mxu0 0
    %398 = vmatprep.subr.bf16.mxu0 0
    %399 = vmatpush1.bf16.xpose.msra.mxu0 0
    %400 = vmatprep.subr.bf16.mxu0 0
    %401 = vmatpush1.bf16.xpose.msra.mxu0 0
    %402 = vmatprep.subr.bf16.mxu0 0
    %403 = vmatpush1.bf16.xpose.msra.mxu0 0
    %404 = vmatprep.subr.bf16.mxu0 0
    %405 = vmatpush1.bf16.xpose.msra.mxu0 0
    %406 = vmatprep.subr.bf16.mxu0 0
    %407 = vmatpush1.bf16.xpose.msra.mxu0 0
    %408 = vmatprep.subr.bf16.mxu0 0
    %409 = vmatpush1.bf16.xpose.msra.mxu0 0
    %410 = vmatprep.subr.bf16.mxu0 0
    %411 = vmatpush1.bf16.xpose.msra.mxu0 0
    %412 = vmatprep.subr.bf16.mxu0 0
    %413 = vmatpush1.bf16.xpose.msra.mxu0 0
    %414 = vmatprep.mubr.bf16.mxu0 0
    %415 = vmatmul.mubr.bf16.gmra.mrb[0].mxu0 %v377
    %v416 = vpop.f32.mrb[0].mxu0
    %v417 = vadd.f32 0.0, %v416
    %v418 = vpop.f32.mrb[0].mxu0
    %v419 = vpop.f32.mrb[0].mxu0
    %v420 = vpop.f32.mrb[0].mxu0
    %421 = vdwg.mxu0
    %422 = vst.msk [vmem:[#allocation2 + $0x28] sm:$0xff] %vm120, %v417
    %423 = vrot.lane.b32.xlu0 %v321, 80
    %v424 = vpop.permute.xlu0 %423
    %425 = vrot.lane.b32.xlu0 %v321, 72
    %v426 = vpop.permute.xlu0 %425
    %v428 = vsel %vm120, %v424, 0
    %v431 = vsel %vm120, %v426, 0
    %433 = vmatprep.subr.bf16.mxu0 0
    %434 = vmatpush1.bf16.xpose.msra.mxu0 %v431
    %435 = vmatprep.subr.bf16.mxu0 0
    %436 = vmatpush1.bf16.xpose.msra.mxu0 0
    %437 = vmatprep.subr.bf16.mxu0 0
    %438 = vmatpush1.bf16.xpose.msra.mxu0 0
    %439 = vmatprep.subr.bf16.mxu0 0
    %440 = vmatpush1.bf16.xpose.msra.mxu0 0
    %441 = vmatprep.subr.bf16.mxu0 0
    %442 = vmatpush1.bf16.xpose.msra.mxu0 0
    %443 = vmatprep.subr.bf16.mxu0 0
    %444 = vmatpush1.bf16.xpose.msra.mxu0 0
    %445 = vmatprep.subr.bf16.mxu0 0
    %446 = vmatpush1.bf16.xpose.msra.mxu0 0
    %447 = vmatprep.subr.bf16.mxu0 0
    %448 = vmatpush1.bf16.xpose.msra.mxu0 0
    %449 = vmatprep.subr.bf16.mxu0 0
    %450 = vmatpush1.bf16.xpose.msra.mxu0 0
    %451 = vmatprep.subr.bf16.mxu0 0
    %452 = vmatpush1.bf16.xpose.msra.mxu0 0
    %453 = vmatprep.subr.bf16.mxu0 0
    %454 = vmatpush1.bf16.xpose.msra.mxu0 0
    %455 = vmatprep.subr.bf16.mxu0 0
    %456 = vmatpush1.bf16.xpose.msra.mxu0 0
    %457 = vmatprep.subr.bf16.mxu0 0
    %458 = vmatpush1.bf16.xpose.msra.mxu0 0
    %459 = vmatprep.subr.bf16.mxu0 0
    %460 = vmatpush1.bf16.xpose.msra.mxu0 0
    %461 = vmatprep.subr.bf16.mxu0 0
    %462 = vmatpush1.bf16.xpose.msra.mxu0 0
    %463 = vmatprep.subr.bf16.mxu0 0
    %464 = vmatpush1.bf16.xpose.msra.mxu0 0
    %465 = vmatprep.mubr.bf16.mxu0 0
    %466 = vmatmul.mubr.bf16.gmra.mrb[0].mxu0 %v428
    %v467 = vpop.f32.mrb[0].mxu0
    %v468 = vadd.f32 0.0, %v467
    %v469 = vpop.f32.mrb[0].mxu0
    %v470 = vpop.f32.mrb[0].mxu0
    %v471 = vpop.f32.mrb[0].mxu0
    %472 = vdwg.mxu0
    %473 = vst.msk [vmem:[#allocation2 + $0x30] sm:$0xff] %vm120, %v468
    %474 = vrot.lane.b32.xlu0 %v321, 56
    %v475 = vpop.permute.xlu0 %474
    %476 = vrot.lane.b32.xlu0 %v321, 48
    %v477 = vpop.permute.xlu0 %476
    %v479 = vsel %vm120, %v475, 0
    %v482 = vsel %vm120, %v477, 0
    %484 = vmatprep.subr.bf16.mxu0 0
    %485 = vmatpush1.bf16.xpose.msra.mxu0 %v482
    %486 = vmatprep.subr.bf16.mxu0 0
    %487 = vmatpush1.bf16.xpose.msra.mxu0 0
    %488 = vmatprep.subr.bf16.mxu0 0
    %489 = vmatpush1.bf16.xpose.msra.mxu0 0
    %490 = vmatprep.subr.bf16.mxu0 0
    %491 = vmatpush1.bf16.xpose.msra.mxu0 0
    %492 = vmatprep.subr.bf16.mxu0 0
    %493 = vmatpush1.bf16.xpose.msra.mxu0 0
    %494 = vmatprep.subr.bf16.mxu0 0
    %495 = vmatpush1.bf16.xpose.msra.mxu0 0
    %496 = vmatprep.subr.bf16.mxu0 0
    %497 = vmatpush1.bf16.xpose.msra.mxu0 0
    %498 = vmatprep.subr.bf16.mxu0 0
    %499 = vmatpush1.bf16.xpose.msra.mxu0 0
    %500 = vmatprep.subr.bf16.mxu0 0
    %501 = vmatpush1.bf16.xpose.msra.mxu0 0
    %502 = vmatprep.subr.bf16.mxu0 0
    %503 = vmatpush1.bf16.xpose.msra.mxu0 0
    %504 = vmatprep.subr.bf16.mxu0 0
    %505 = vmatpush1.bf16.xpose.msra.mxu0 0
    %506 = vmatprep.subr.bf16.mxu0 0
    %507 = vmatpush1.bf16.xpose.msra.mxu0 0
    %508 = vmatprep.subr.bf16.mxu0 0
    %509 = vmatpush1.bf16.xpose.msra.mxu0 0
    %510 = vmatprep.subr.bf16.mxu0 0
    %511 = vmatpush1.bf16.xpose.msra.mxu0 0
    %512 = vmatprep.subr.bf16.mxu0 0
    %513 = vmatpush1.bf16.xpose.msra.mxu0 0
    %514 = vmatprep.subr.bf16.mxu0 0
    %515 = vmatpush1.bf16.xpose.msra.mxu0 0
    %516 = vmatprep.mubr.bf16.mxu0 0
    %517 = vmatmul.mubr.bf16.gmra.mrb[0].mxu0 %v479
    %v518 = vpop.f32.mrb[0].mxu0
    %v519 = vadd.f32 0.0, %v518
    %v520 = vpop.f32.mrb[0].mxu0
    %v521 = vpop.f32.mrb[0].mxu0
    %v522 = vpop.f32.mrb[0].mxu0
    %523 = vdwg.mxu0
    %524 = vst.msk [vmem:[#allocation2 + $0x38] sm:$0xff] %vm120, %v519
    %v525 = vld [vmem:[#allocation2] sm:$0xff]
    %v526 = vld [vmem:[#allocation2 + $0x8] sm:$0xff]
    %v527 = vld [vmem:[#allocation2 + $0x10] sm:$0xff]
    %v528 = vld [vmem:[#allocation2 + $0x18] sm:$0xff]
    %v529 = vld [vmem:[#allocation2 + $0x20] sm:$0xff]
    %v530 = vld [vmem:[#allocation2 + $0x28] sm:$0xff]
    %v531 = vld [vmem:[#allocation2 + $0x30] sm:$0xff]
    %v532 = vld [vmem:[#allocation2 + $0x38] sm:$0xff]
    %v533 = vld [vmem:[%s6] sm:$0xff]
    %v534 = vld [vmem:[%s6 + $0x8] sm:$0xff]
    %v535 = vld [vmem:[%s6 + $0x10] sm:$0xff]
    %v536 = vld [vmem:[%s6 + $0x18] sm:$0xff]
    %v537 = vld [vmem:[%s6 + $0x20] sm:$0xff]
    %v538 = vld [vmem:[%s6 + $0x28] sm:$0xff]
    %v539 = vld [vmem:[%s6 + $0x30] sm:$0xff]
    %v540 = vld [vmem:[%s6 + $0x38] sm:$0xff]
    %v541 = vadd.f32 %v525, %v533
    %v542 = vadd.f32 %v526, %v534
    %v543 = vadd.f32 %v527, %v535
    %v544 = vadd.f32 %v528, %v536
    %v545 = vadd.f32 %v529, %v537
    %v546 = vadd.f32 %v530, %v538
    %v547 = vadd.f32 %v531, %v539
    %v548 = vadd.f32 %v532, %v540
    %v549 = vsel %vm120, %v541, -inf
    %550 = vmax.xlane.f32.xlu0 %v549
    %v551 = vpop.xlane.xlu0 %550
    %v552 = vsel %vm120, %v542, -inf
    %553 = vmax.xlane.f32.xlu0 %v552
    %v554 = vpop.xlane.xlu0 %553
    %v555 = vsel %vm120, %v543, -inf
    %556 = vmax.xlane.f32.xlu0 %v555
    %v557 = vpop.xlane.xlu0 %556
    %v558 = vsel %vm120, %v544, -inf
    %559 = vmax.xlane.f32.xlu0 %v558
    %v560 = vpop.xlane.xlu0 %559
    %v561 = vsel %vm120, %v545, -inf
    %562 = vmax.xlane.f32.xlu0 %v561
    %v563 = vpop.xlane.xlu0 %562
    %v564 = vsel %vm120, %v546, -inf
    %565 = vmax.xlane.f32.xlu0 %v564
    %v566 = vpop.xlane.xlu0 %565
    %v567 = vsel %vm120, %v547, -inf
    %568 = vmax.xlane.f32.xlu0 %v567
    %v569 = vpop.xlane.xlu0 %568
    %v570 = vsel %vm120, %v548, -inf
    %571 = vmax.xlane.f32.xlu0 %v570
    %v572 = vpop.xlane.xlu0 %571
    %v573 = vsub.f32 %v541, %v551
    %v574 = vsub.f32 %v542, %v554
    %v575 = vsub.f32 %v543, %v557
    %v576 = vsub.f32 %v544, %v560
    %v577 = vsub.f32 %v545, %v563
    %v578 = vsub.f32 %v546, %v566
    %v579 = vsub.f32 %v547, %v569
    %v580 = vsub.f32 %v548, %v572
    %v581 = vmul.f32 %v573, 1.442695
    %v582 = vpow.pop %v581
    %v583 = vmul.f32 %v574, 1.442695
    %v584 = vpow.pop %v583
    %v585 = vmul.f32 %v575, 1.442695
    %v586 = vpow.pop %v585
    %v587 = vmul.f32 %v576, 1.442695
    %v588 = vpow.pop %v587
    %v589 = vmul.f32 %v577, 1.442695
    %v590 = vpow.pop %v589
    %v591 = vmul.f32 %v578, 1.442695
    %v592 = vpow.pop %v591
    %v593 = vmul.f32 %v579, 1.442695
    %v594 = vpow.pop %v593
    %v595 = vmul.f32 %v580, 1.442695
    %v596 = vpow.pop %v595
    %v597 = vsel %vm120, %v582, 0.0
    %598 = vadd.xlane.f32.xlu0 %v597
    %v599 = vpop.xlane.xlu0 %598
    %v600 = vsel %vm120, %v584, 0.0
    %601 = vadd.xlane.f32.xlu0 %v600
    %v602 = vpop.xlane.xlu0 %601
    %v603 = vsel %vm120, %v586, 0.0
    %604 = vadd.xlane.f32.xlu0 %v603
    %v605 = vpop.xlane.xlu0 %604
    %v606 = vsel %vm120, %v588, 0.0
    %607 = vadd.xlane.f32.xlu0 %v606
    %v608 = vpop.xlane.xlu0 %607
    %v609 = vsel %vm120, %v590, 0.0
    %610 = vadd.xlane.f32.xlu0 %v609
    %v611 = vpop.xlane.xlu0 %610
    %v612 = vsel %vm120, %v592, 0.0
    %613 = vadd.xlane.f32.xlu0 %v612
    %v614 = vpop.xlane.xlu0 %613
    %v615 = vsel %vm120, %v594, 0.0
    %616 = vadd.xlane.f32.xlu0 %v615
    %v617 = vpop.xlane.xlu0 %616
    %v618 = vsel %vm120, %v596, 0.0
    %619 = vadd.xlane.f32.xlu0 %v618
    %v620 = vpop.xlane.xlu0 %619
    %v621 = vrcp.pop %v599
    %v622 = vrcp.pop %v602
    %v623 = vrcp.pop %v605
    %v624 = vrcp.pop %v608
    %v625 = vrcp.pop %v611
    %v626 = vrcp.pop %v614
    %v627 = vrcp.pop %v617
    %v628 = vrcp.pop %v620
    %v629 = vmul.f32 %v582, %v621
    %v630 = vmul.f32 %v584, %v622
    %v631 = vmul.f32 %v586, %v623
    %v632 = vmul.f32 %v588, %v624
    %v633 = vmul.f32 %v590, %v625
    %v634 = vmul.f32 %v592, %v626
    %v635 = vmul.f32 %v594, %v627
    %v636 = vmul.f32 %v596, %v628
    %v637 = vpack.c.bf16 %v630, %v629
    %v638 = vpack.c.bf16 %v632, %v631
    %v639 = vpack.c.bf16 %v634, %v633
    %v640 = vpack.c.bf16 %v636, %v635
    %641 = vrot.lane.b32.xlu0 %v116, 112
    %v642 = vpop.permute.xlu0 %641
    %v644 = vsel %vm120, %v637, 0
    %vm646 = vcmask 1043456
    %v648 = vsel %vm646, %v642, 0
    %650 = vmatprep.subr.bf16.mxu0 0
    %651 = vmatpush1.bf16.msra.mxu0 %v648
    %652 = vmatprep.subr.bf16.mxu0 0
    %653 = vmatpush1.bf16.msra.mxu0 0
    %654 = vmatprep.subr.bf16.mxu0 0
    %655 = vmatpush1.bf16.msra.mxu0 0
    %656 = vmatprep.subr.bf16.mxu0 0
    %657 = vmatpush1.bf16.msra.mxu0 0
    %658 = vmatprep.subr.bf16.mxu0 0
    %659 = vmatpush1.bf16.msra.mxu0 0
    %660 = vmatprep.subr.bf16.mxu0 0
    %661 = vmatpush1.bf16.msra.mxu0 0
    %662 = vmatprep.subr.bf16.mxu0 0
    %663 = vmatpush1.bf16.msra.mxu0 0
    %664 = vmatprep.subr.bf16.mxu0 0
    %665 = vmatpush1.bf16.msra.mxu0 0
    %666 = vmatprep.subr.bf16.mxu0 0
    %667 = vmatpush1.bf16.msra.mxu0 0
    %668 = vmatprep.subr.bf16.mxu0 0
    %669 = vmatpush1.bf16.msra.mxu0 0
    %670 = vmatprep.subr.bf16.mxu0 0
    %671 = vmatpush1.bf16.msra.mxu0 0
    %672 = vmatprep.subr.bf16.mxu0 0
    %673 = vmatpush1.bf16.msra.mxu0 0
    %674 = vmatprep.subr.bf16.mxu0 0
    %675 = vmatpush1.bf16.msra.mxu0 0
    %676 = vmatprep.subr.bf16.mxu0 0
    %677 = vmatpush1.bf16.msra.mxu0 0
    %678 = vmatprep.subr.bf16.mxu0 0
    %679 = vmatpush1.bf16.msra.mxu0 0
    %680 = vmatprep.subr.bf16.mxu0 0
    %681 = vmatpush1.bf16.msra.mxu0 0
    %682 = vmatprep.mubr.bf16.mxu0 0
    %683 = vmatmul.mubr.bf16.gmra.mrb[0].mxu0 %v644
    %v684 = vpop.f32.mrb[0].mxu0
    %v685 = vadd.f32 0.0, %v684
    %v686 = vpop.f32.mrb[0].mxu0
    %v687 = vpop.f32.mrb[0].mxu0
    %v688 = vpop.f32.mrb[0].mxu0
    %689 = vdwg.mxu0
    %690 = vst.msk [vmem:[#allocation3] sm:$0xff] %vm120, %v685
    %v692 = vrot.slane %v637, 4
    %693 = vrot.lane.b32.xlu0 %v116, 88
    %v694 = vpop.permute.xlu0 %693
    %v696 = vsel %vm120, %v692, 0
    %v699 = vsel %vm646, %v694, 0
    %701 = vmatprep.subr.bf16.mxu0 0
    %702 = vmatpush1.bf16.msra.mxu0 %v699
    %703 = vmatprep.subr.bf16.mxu0 0
    %704 = vmatpush1.bf16.msra.mxu0 0
    %705 = vmatprep.subr.bf16.mxu0 0
    %706 = vmatpush1.bf16.msra.mxu0 0
    %707 = vmatprep.subr.bf16.mxu0 0
    %708 = vmatpush1.bf16.msra.mxu0 0
    %709 = vmatprep.subr.bf16.mxu0 0
    %710 = vmatpush1.bf16.msra.mxu0 0
    %711 = vmatprep.subr.bf16.mxu0 0
    %712 = vmatpush1.bf16.msra.mxu0 0
    %713 = vmatprep.subr.bf16.mxu0 0
    %714 = vmatpush1.bf16.msra.mxu0 0
    %715 = vmatprep.subr.bf16.mxu0 0
    %716 = vmatpush1.bf16.msra.mxu0 0
    %717 = vmatprep.subr.bf16.mxu0 0
    %718 = vmatpush1.bf16.msra.mxu0 0
    %719 = vmatprep.subr.bf16.mxu0 0
    %720 = vmatpush1.bf16.msra.mxu0 0
    %721 = vmatprep.subr.bf16.mxu0 0
    %722 = vmatpush1.bf16.msra.mxu0 0
    %723 = vmatprep.subr.bf16.mxu0 0
    %724 = vmatpush1.bf16.msra.mxu0 0
    %725 = vmatprep.subr.bf16.mxu0 0
    %726 = vmatpush1.bf16.msra.mxu0 0
    %727 = vmatprep.subr.bf16.mxu0 0
    %728 = vmatpush1.bf16.msra.mxu0 0
    %729 = vmatprep.subr.bf16.mxu0 0
    %730 = vmatpush1.bf16.msra.mxu0 0
    %731 = vmatprep.subr.bf16.mxu0 0
    %732 = vmatpush1.bf16.msra.mxu0 0
    %733 = vmatprep.mubr.bf16.mxu0 0
    %734 = vmatmul.mubr.bf16.gmra.mrb[0].mxu0 %v696
    %v735 = vpop.f32.mrb[0].mxu0
    %v736 = vadd.f32 0.0, %v735
    %v737 = vpop.f32.mrb[0].mxu0
    %v738 = vpop.f32.mrb[0].mxu0
    %v739 = vpop.f32.mrb[0].mxu0
    %740 = vdwg.mxu0
    %742 = vrot.lane.b32.xlu0 %v736, 8
    %v743 = vpop.permute.xlu0 %742
    %vm745 = vcmask 130112
    %746 = vst.msk [vmem:[#allocation3] sm:$0xff] %vm745, %v743
    %747 = vrot.lane.b32.xlu0 %v116, 64
    %v748 = vpop.permute.xlu0 %747
    %v750 = vsel %vm120, %v638, 0
    %v753 = vsel %vm646, %v748, 0
    %755 = vmatprep.subr.bf16.mxu0 0
    %756 = vmatpush1.bf16.msra.mxu0 %v753
    %757 = vmatprep.subr.bf16.mxu0 0
    %758 = vmatpush1.bf16.msra.mxu0 0
    %759 = vmatprep.subr.bf16.mxu0 0
    %760 = vmatpush1.bf16.msra.mxu0 0
    %761 = vmatprep.subr.bf16.mxu0 0
    %762 = vmatpush1.bf16.msra.mxu0 0
    %763 = vmatprep.subr.bf16.mxu0 0
    %764 = vmatpush1.bf16.msra.mxu0 0
    %765 = vmatprep.subr.bf16.mxu0 0
    %766 = vmatpush1.bf16.msra.mxu0 0
    %767 = vmatprep.subr.bf16.mxu0 0
    %768 = vmatpush1.bf16.msra.mxu0 0
    %769 = vmatprep.subr.bf16.mxu0 0
    %770 = vmatpush1.bf16.msra.mxu0 0
    %771 = vmatprep.subr.bf16.mxu0 0
    %772 = vmatpush1.bf16.msra.mxu0 0
    %773 = vmatprep.subr.bf16.mxu0 0
    %774 = vmatpush1.bf16.msra.mxu0 0
    %775 = vmatprep.subr.bf16.mxu0 0
    %776 = vmatpush1.bf16.msra.mxu0 0
    %777 = vmatprep.subr.bf16.mxu0 0
    %778 = vmatpush1.bf16.msra.mxu0 0
    %779 = vmatprep.subr.bf16.mxu0 0
    %780 = vmatpush1.bf16.msra.mxu0 0
    %781 = vmatprep.subr.bf16.mxu0 0
    %782 = vmatpush1.bf16.msra.mxu0 0
    %783 = vmatprep.subr.bf16.mxu0 0
    %784 = vmatpush1.bf16.msra.mxu0 0
    %785 = vmatprep.subr.bf16.mxu0 0
    %786 = vmatpush1.bf16.msra.mxu0 0
    %787 = vmatprep.mubr.bf16.mxu0 0
    %788 = vmatmul.mubr.bf16.gmra.mrb[0].mxu0 %v750
    %v789 = vpop.f32.mrb[0].mxu0
    %v790 = vadd.f32 0.0, %v789
    %v791 = vpop.f32.mrb[0].mxu0
    %v792 = vpop.f32.mrb[0].mxu0
    %v793 = vpop.f32.mrb[0].mxu0
    %794 = vdwg.mxu0
    %796 = vrot.lane.b32.xlu0 %v790, 16
    %v797 = vpop.permute.xlu0 %796
    %vm799 = vcmask 195712
    %800 = vst.msk [vmem:[#allocation3] sm:$0xff] %vm799, %v797
    %v802 = vrot.slane %v638, 4
    %803 = vrot.lane.b32.xlu0 %v116, 40
    %v804 = vpop.permute.xlu0 %803
    %v806 = vsel %vm120, %v802, 0
    %v809 = vsel %vm646, %v804, 0
    %811 = vmatprep.subr.bf16.mxu0 0
    %812 = vmatpush1.bf16.msra.mxu0 %v809
    %813 = vmatprep.subr.bf16.mxu0 0
    %814 = vmatpush1.bf16.msra.mxu0 0
    %815 = vmatprep.subr.bf16.mxu0 0
    %816 = vmatpush1.bf16.msra.mxu0 0
    %817 = vmatprep.subr.bf16.mxu0 0
    %818 = vmatpush1.bf16.msra.mxu0 0
    %819 = vmatprep.subr.bf16.mxu0 0
    %820 = vmatpush1.bf16.msra.mxu0 0
    %821 = vmatprep.subr.bf16.mxu0 0
    %822 = vmatpush1.bf16.msra.mxu0 0
    %823 = vmatprep.subr.bf16.mxu0 0
    %824 = vmatpush1.bf16.msra.mxu0 0
    %825 = vmatprep.subr.bf16.mxu0 0
    %826 = vmatpush1.bf16.msra.mxu0 0
    %827 = vmatprep.subr.bf16.mxu0 0
    %828 = vmatpush1.bf16.msra.mxu0 0
    %829 = vmatprep.subr.bf16.mxu0 0
    %830 = vmatpush1.bf16.msra.mxu0 0
    %831 = vmatprep.subr.bf16.mxu0 0
    %832 = vmatpush1.bf16.msra.mxu0 0
    %833 = vmatprep.subr.bf16.mxu0 0
    %834 = vmatpush1.bf16.msra.mxu0 0
    %835 = vmatprep.subr.bf16.mxu0 0
    %836 = vmatpush1.bf16.msra.mxu0 0
    %837 = vmatprep.subr.bf16.mxu0 0
    %838 = vmatpush1.bf16.msra.mxu0 0
    %839 = vmatprep.subr.bf16.mxu0 0
    %840 = vmatpush1.bf16.msra.mxu0 0
    %841 = vmatprep.subr.bf16.mxu0 0
    %842 = vmatpush1.bf16.msra.mxu0 0
    %843 = vmatprep.mubr.bf16.mxu0 0
    %844 = vmatmul.mubr.bf16.gmra.mrb[0].mxu0 %v806
    %v845 = vpop.f32.mrb[0].mxu0
    %v846 = vadd.f32 0.0, %v845
    %v847 = vpop.f32.mrb[0].mxu0
    %v848 = vpop.f32.mrb[0].mxu0
    %v849 = vpop.f32.mrb[0].mxu0
    %850 = vdwg.mxu0
    %852 = vrot.lane.b32.xlu0 %v846, 24
    %v853 = vpop.permute.xlu0 %852
    %vm855 = vcmask 261312
    %856 = vst.msk [vmem:[#allocation3] sm:$0xff] %vm855, %v853
    %857 = vrot.lane.b32.xlu0 %v321, 112
    %v858 = vpop.permute.xlu0 %857
    %v860 = vsel %vm120, %v639, 0
    %v863 = vsel %vm646, %v858, 0
    %865 = vmatprep.subr.bf16.mxu0 0
    %866 = vmatpush1.bf16.msra.mxu0 %v863
    %867 = vmatprep.subr.bf16.mxu0 0
    %868 = vmatpush1.bf16.msra.mxu0 0
    %869 = vmatprep.subr.bf16.mxu0 0
    %870 = vmatpush1.bf16.msra.mxu0 0
    %871 = vmatprep.subr.bf16.mxu0 0
    %872 = vmatpush1.bf16.msra.mxu0 0
    %873 = vmatprep.subr.bf16.mxu0 0
    %874 = vmatpush1.bf16.msra.mxu0 0
    %875 = vmatprep.subr.bf16.mxu0 0
    %876 = vmatpush1.bf16.msra.mxu0 0
    %877 = vmatprep.subr.bf16.mxu0 0
    %878 = vmatpush1.bf16.msra.mxu0 0
    %879 = vmatprep.subr.bf16.mxu0 0
    %880 = vmatpush1.bf16.msra.mxu0 0
    %881 = vmatprep.subr.bf16.mxu0 0
    %882 = vmatpush1.bf16.msra.mxu0 0
    %883 = vmatprep.subr.bf16.mxu0 0
    %884 = vmatpush1.bf16.msra.mxu0 0
    %885 = vmatprep.subr.bf16.mxu0 0
    %886 = vmatpush1.bf16.msra.mxu0 0
    %887 = vmatprep.subr.bf16.mxu0 0
    %888 = vmatpush1.bf16.msra.mxu0 0
    %889 = vmatprep.subr.bf16.mxu0 0
    %890 = vmatpush1.bf16.msra.mxu0 0
    %891 = vmatprep.subr.bf16.mxu0 0
    %892 = vmatpush1.bf16.msra.mxu0 0
    %893 = vmatprep.subr.bf16.mxu0 0
    %894 = vmatpush1.bf16.msra.mxu0 0
    %895 = vmatprep.subr.bf16.mxu0 0
    %896 = vmatpush1.bf16.msra.mxu0 0
    %897 = vmatprep.mubr.bf16.mxu0 0
    %898 = vmatmul.mubr.bf16.gmra.mrb[0].mxu0 %v860
    %v899 = vpop.f32.mrb[0].mxu0
    %v900 = vadd.f32 0.0, %v899
    %v901 = vpop.f32.mrb[0].mxu0
    %v902 = vpop.f32.mrb[0].mxu0
    %v903 = vpop.f32.mrb[0].mxu0
    %904 = vdwg.mxu0
    %905 = vst.msk [vmem:[#allocation3 + $0x8] sm:$0xff] %vm120, %v900
    %v907 = vrot.slane %v639, 4
    %908 = vrot.lane.b32.xlu0 %v321, 88
    %v909 = vpop.permute.xlu0 %908
    %v911 = vsel %vm120, %v907, 0
    %v914 = vsel %vm646, %v909, 0
    %916 = vmatprep.subr.bf16.mxu0 0
    %917 = vmatpush1.bf16.msra.mxu0 %v914
    %918 = vmatprep.subr.bf16.mxu0 0
    %919 = vmatpush1.bf16.msra.mxu0 0
    %920 = vmatprep.subr.bf16.mxu0 0
    %921 = vmatpush1.bf16.msra.mxu0 0
    %922 = vmatprep.subr.bf16.mxu0 0
    %923 = vmatpush1.bf16.msra.mxu0 0
    %924 = vmatprep.subr.bf16.mxu0 0
    %925 = vmatpush1.bf16.msra.mxu0 0
    %926 = vmatprep.subr.bf16.mxu0 0
    %927 = vmatpush1.bf16.msra.mxu0 0
    %928 = vmatprep.subr.bf16.mxu0 0
    %929 = vmatpush1.bf16.msra.mxu0 0
    %930 = vmatprep.subr.bf16.mxu0 0
    %931 = vmatpush1.bf16.msra.mxu0 0
    %932 = vmatprep.subr.bf16.mxu0 0
    %933 = vmatpush1.bf16.msra.mxu0 0
    %934 = vmatprep.subr.bf16.mxu0 0
    %935 = vmatpush1.bf16.msra.mxu0 0
    %936 = vmatprep.subr.bf16.mxu0 0
    %937 = vmatpush1.bf16.msra.mxu0 0
    %938 = vmatprep.subr.bf16.mxu0 0
    %939 = vmatpush1.bf16.msra.mxu0 0
    %940 = vmatprep.subr.bf16.mxu0 0
    %941 = vmatpush1.bf16.msra.mxu0 0
    %942 = vmatprep.subr.bf16.mxu0 0
    %943 = vmatpush1.bf16.msra.mxu0 0
    %944 = vmatprep.subr.bf16.mxu0 0
    %945 = vmatpush1.bf16.msra.mxu0 0
    %946 = vmatprep.subr.bf16.mxu0 0
    %947 = vmatpush1.bf16.msra.mxu0 0
    %948 = vmatprep.mubr.bf16.mxu0 0
    %949 = vmatmul.mubr.bf16.gmra.mrb[0].mxu0 %v911
    %v950 = vpop.f32.mrb[0].mxu0
    %v951 = vadd.f32 0.0, %v950
    %v952 = vpop.f32.mrb[0].mxu0
    %v953 = vpop.f32.mrb[0].mxu0
    %v954 = vpop.f32.mrb[0].mxu0
    %955 = vdwg.mxu0
    %957 = vrot.lane.b32.xlu0 %v951, 8
    %v958 = vpop.permute.xlu0 %957
    %960 = vst.msk [vmem:[#allocation3 + $0x8] sm:$0xff] %vm745, %v958
    %961 = vrot.lane.b32.xlu0 %v321, 64
    %v962 = vpop.permute.xlu0 %961
    %v964 = vsel %vm120, %v640, 0
    %v967 = vsel %vm646, %v962, 0
    %969 = vmatprep.subr.bf16.mxu0 0
    %970 = vmatpush1.bf16.msra.mxu0 %v967
    %971 = vmatprep.subr.bf16.mxu0 0
    %972 = vmatpush1.bf16.msra.mxu0 0
    %973 = vmatprep.subr.bf16.mxu0 0
    %974 = vmatpush1.bf16.msra.mxu0 0
    %975 = vmatprep.subr.bf16.mxu0 0
    %976 = vmatpush1.bf16.msra.mxu0 0
    %977 = vmatprep.subr.bf16.mxu0 0
    %978 = vmatpush1.bf16.msra.mxu0 0
    %979 = vmatprep.subr.bf16.mxu0 0
    %980 = vmatpush1.bf16.msra.mxu0 0
    %981 = vmatprep.subr.bf16.mxu0 0
    %982 = vmatpush1.bf16.msra.mxu0 0
    %983 = vmatprep.subr.bf16.mxu0 0
    %984 = vmatpush1.bf16.msra.mxu0 0
    %985 = vmatprep.subr.bf16.mxu0 0
    %986 = vmatpush1.bf16.msra.mxu0 0
    %987 = vmatprep.subr.bf16.mxu0 0
    %988 = vmatpush1.bf16.msra.mxu0 0
    %989 = vmatprep.subr.bf16.mxu0 0
    %990 = vmatpush1.bf16.msra.mxu0 0
    %991 = vmatprep.subr.bf16.mxu0 0
    %992 = vmatpush1.bf16.msra.mxu0 0
    %993 = vmatprep.subr.bf16.mxu0 0
    %994 = vmatpush1.bf16.msra.mxu0 0
    %995 = vmatprep.subr.bf16.mxu0 0
    %996 = vmatpush1.bf16.msra.mxu0 0
    %997 = vmatprep.subr.bf16.mxu0 0
    %998 = vmatpush1.bf16.msra.mxu0 0
    %999 = vmatprep.subr.bf16.mxu0 0
    %1000 = vmatpush1.bf16.msra.mxu0 0
    %1001 = vmatprep.mubr.bf16.mxu0 0
    %1002 = vmatmul.mubr.bf16.gmra.mrb[0].mxu0 %v964
    %v1003 = vpop.f32.mrb[0].mxu0
    %v1004 = vadd.f32 0.0, %v1003
    %v1005 = vpop.f32.mrb[0].mxu0
    %v1006 = vpop.f32.mrb[0].mxu0
    %v1007 = vpop.f32.mrb[0].mxu0
    %1008 = vdwg.mxu0
    %1010 = vrot.lane.b32.xlu0 %v1004, 16
    %v1011 = vpop.permute.xlu0 %1010
    %1013 = vst.msk [vmem:[#allocation3 + $0x8] sm:$0xff] %vm799, %v1011
    %v1015 = vrot.slane %v640, 4
    %1016 = vrot.lane.b32.xlu0 %v321, 40
    %v1017 = vpop.permute.xlu0 %1016
    %v1019 = vsel %vm120, %v1015, 0
    %v1022 = vsel %vm646, %v1017, 0
    %1024 = vmatprep.subr.bf16.mxu0 0
    %1025 = vmatpush1.bf16.msra.mxu0 %v1022
    %1026 = vmatprep.subr.bf16.mxu0 0
    %1027 = vmatpush1.bf16.msra.mxu0 0
    %1028 = vmatprep.subr.bf16.mxu0 0
    %1029 = vmatpush1.bf16.msra.mxu0 0
    %1030 = vmatprep.subr.bf16.mxu0 0
    %1031 = vmatpush1.bf16.msra.mxu0 0
    %1032 = vmatprep.subr.bf16.mxu0 0
    %1033 = vmatpush1.bf16.msra.mxu0 0
    %1034 = vmatprep.subr.bf16.mxu0 0
    %1035 = vmatpush1.bf16.msra.mxu0 0
    %1036 = vmatprep.subr.bf16.mxu0 0
    %1037 = vmatpush1.bf16.msra.mxu0 0
    %1038 = vmatprep.subr.bf16.mxu0 0
    %1039 = vmatpush1.bf16.msra.mxu0 0
    %1040 = vmatprep.subr.bf16.mxu0 0
    %1041 = vmatpush1.bf16.msra.mxu0 0
    %1042 = vmatprep.subr.bf16.mxu0 0
    %1043 = vmatpush1.bf16.msra.mxu0 0
    %1044 = vmatprep.subr.bf16.mxu0 0
    %1045 = vmatpush1.bf16.msra.mxu0 0
    %1046 = vmatprep.subr.bf16.mxu0 0
    %1047 = vmatpush1.bf16.msra.mxu0 0
    %1048 = vmatprep.subr.bf16.mxu0 0
    %1049 = vmatpush1.bf16.msra.mxu0 0
    %1050 = vmatprep.subr.bf16.mxu0 0
    %1051 = vmatpush1.bf16.msra.mxu0 0
    %1052 = vmatprep.subr.bf16.mxu0 0
    %1053 = vmatpush1.bf16.msra.mxu0 0
    %1054 = vmatprep.subr.bf16.mxu0 0
    %1055 = vmatpush1.bf16.msra.mxu0 0
    %1056 = vmatprep.mubr.bf16.mxu0 0
    %1057 = vmatmul.mubr.bf16.gmra.mrb[0].mxu0 %v1019
    %v1058 = vpop.f32.mrb[0].mxu0
    %v1059 = vadd.f32 0.0, %v1058
    %v1060 = vpop.f32.mrb[0].mxu0
    %v1061 = vpop.f32.mrb[0].mxu0
    %v1062 = vpop.f32.mrb[0].mxu0
    %1063 = vdwg.mxu0
    %1065 = vrot.lane.b32.xlu0 %v1059, 24
    %v1066 = vpop.permute.xlu0 %1065
    %1068 = vst.msk [vmem:[#allocation3 + $0x8] sm:$0xff] %vm855, %v1066
    %v1069 = vld [vmem:[#allocation3] sm:$0xff]
    %v1070 = vld [vmem:[#allocation3 + $0x8] sm:$0xff]
    %v1071 = vpack.c.bf16 %v1070, %v1069
    %v1072 = vld [vmem:[%s3] sm:$0xf]
    %v1073 = vld [vmem:[%s3 + $0x4] sm:$0xf]
    %v1074 = vld [vmem:[%s3 + $0x8] sm:$0xf]
    %v1075 = vld [vmem:[%s3 + $0xc] sm:$0xf]
    %v1080 = vunpack.c.l.b16 %v1072
    %v1081 = vunpack.c.l.b16 %v1073
    %v1082 = vunpack.c.l.b16 %v1074
    %v1083 = vunpack.c.l.b16 %v1075
    %v1084 = vpack.c.b16 %v1081, %v1080
    %v1085 = vpack.c.b16 %v1083, %v1082
    %v1089 = vsel %vm33, %v1071, 0
    %1091 = vmatprep.subr.bf16.mxu0 0
    %1092 = vmatpush1.bf16.msra.mxu0 %v1084
    %1093 = vmatprep.subr.bf16.mxu0 0
    %1094 = vmatpush1.bf16.msra.mxu0 %v1085
    %1095 = vmatprep.subr.bf16.mxu0 0
    %1096 = vmatpush1.bf16.msra.mxu0 0
    %1097 = vmatprep.subr.bf16.mxu0 0
    %1098 = vmatpush1.bf16.msra.mxu0 0
    %1099 = vmatprep.subr.bf16.mxu0 0
    %1100 = vmatpush1.bf16.msra.mxu0 0
    %1101 = vmatprep.subr.bf16.mxu0 0
    %1102 = vmatpush1.bf16.msra.mxu0 0
    %1103 = vmatprep.subr.bf16.mxu0 0
    %1104 = vmatpush1.bf16.msra.mxu0 0
    %1105 = vmatprep.subr.bf16.mxu0 0
    %1106 = vmatpush1.bf16.msra.mxu0 0
    %1107 = vmatprep.subr.bf16.mxu0 0
    %1108 = vmatpush1.bf16.msra.mxu0 0
    %1109 = vmatprep.subr.bf16.mxu0 0
    %1110 = vmatpush1.bf16.msra.mxu0 0
    %1111 = vmatprep.subr.bf16.mxu0 0
    %1112 = vmatpush1.bf16.msra.mxu0 0
    %1113 = vmatprep.subr.bf16.mxu0 0
    %1114 = vmatpush1.bf16.msra.mxu0 0
    %1115 = vmatprep.subr.bf16.mxu0 0
    %1116 = vmatpush1.bf16.msra.mxu0 0
    %1117 = vmatprep.subr.bf16.mxu0 0
    %1118 = vmatpush1.bf16.msra.mxu0 0
    %1119 = vmatprep.subr.bf16.mxu0 0
    %1120 = vmatpush1.bf16.msra.mxu0 0
    %1121 = vmatprep.subr.bf16.mxu0 0
    %1122 = vmatpush1.bf16.msra.mxu0 0
    %1123 = vmatprep.mubr.bf16.mxu0 0
    %1124 = vmatmul.mubr.bf16.gmra.mrb[0].mxu0 %v1089
    %v1125 = vpop.f32.mrb[0].mxu0
    %v1126 = vadd.f32 0.0, %v1125
    %v1127 = vpop.f32.mrb[0].mxu0
    %v1128 = vpop.f32.mrb[0].mxu0
    %v1129 = vadd.f32 0.0, %v1128
    %v1130 = vpop.f32.mrb[0].mxu0
    %1131 = vdwg.mxu0
    %v1132 = vadd.f32 %v28, %v1126
    %v1133 = vadd.f32 %v29, %v1129
    %v1134 = vmul.f32 %v1132, %v1132
    %v1135 = vmul.f32 %v1133, %v1133
    %v1136 = vsel %vm33, %v1134, 0.0
    %1137 = vadd.xlane.f32.xlu0 %v1136
    %v1138 = vpop.xlane.xlu0 %1137
    %v1139 = vsel %vm33, %v1135, 0.0
    %1140 = vadd.xlane.f32.xlu0 %v1139
    %v1141 = vpop.xlane.xlu0 %1140
    %v1142 = vmul.f32 %v1138, %v40
    %v1143 = vmul.f32 %v1141, %v40
    %v1144 = vadd.f32 %v1142, 1e-06
    %v1145 = vadd.f32 %v1143, 1e-06
    %v1146 = vrsqrt.pop %v1144
    %v1147 = vrsqrt.pop %v1145
    %v1148 = vmul.f32 %v1132, %v1146
    %v1149 = vmul.f32 %v1133, %v1147
    %v1150 = vlaneseq
    %v1151 = vshrl.u32 %v1150, 7
    %v1152 = vsub.s32 1, %v1151
    %v1153 = vrot.slane %v30, %v1152
    %v1154 = vmul.f32 %v1148, %v1153
    %v1155 = vmul.f32 %v1149, %v1153
    %v1156 = vpack.c.bf16 %v1155, %v1154
    %v1157 = vld [vmem:[%s4] sm:$0xf]
    %v1158 = vld [vmem:[%s4 + $0x4] sm:$0xf]
    %v1159 = vld [vmem:[%s4 + $0x8] sm:$0xf]
    %v1160 = vld [vmem:[%s4 + $0xc] sm:$0xf]
    %v1165 = vunpack.c.l.b16 %v1157
    %v1166 = vunpack.c.l.b16 %v1158
    %v1167 = vunpack.c.l.b16 %v1159
    %v1168 = vunpack.c.l.b16 %v1160
    %v1169 = vpack.c.b16 %v1166, %v1165
    %v1170 = vpack.c.b16 %v1168, %v1167
    %v1174 = vsel %vm33, %v1156, 0
    %1176 = vmatprep.subr.bf16.mxu0 0
    %1177 = vmatpush1.bf16.msra.mxu0 %v1169
    %1178 = vmatprep.subr.bf16.mxu0 0
    %1179 = vmatpush1.bf16.msra.mxu0 %v1170
    %1180 = vmatprep.subr.bf16.mxu0 0
    %1181 = vmatpush1.bf16.msra.mxu0 0
    %1182 = vmatprep.subr.bf16.mxu0 0
    %1183 = vmatpush1.bf16.msra.mxu0 0
    %1184 = vmatprep.subr.bf16.mxu0 0
    %1185 = vmatpush1.bf16.msra.mxu0 0
    %1186 = vmatprep.subr.bf16.mxu0 0
    %1187 = vmatpush1.bf16.msra.mxu0 0
    %1188 = vmatprep.subr.bf16.mxu0 0
    %1189 = vmatpush1.bf16.msra.mxu0 0
    %1190 = vmatprep.subr.bf16.mxu0 0
    %1191 = vmatpush1.bf16.msra.mxu0 0
    %1192 = vmatprep.subr.bf16.mxu0 0
    %1193 = vmatpush1.bf16.msra.mxu0 0
    %1194 = vmatprep.subr.bf16.mxu0 0
    %1195 = vmatpush1.bf16.msra.mxu0 0
    %1196 = vmatprep.subr.bf16.mxu0 0
    %1197 = vmatpush1.bf16.msra.mxu0 0
    %1198 = vmatprep.subr.bf16.mxu0 0
    %1199 = vmatpush1.bf16.msra.mxu0 0
    %1200 = vmatprep.subr.bf16.mxu0 0
    %1201 = vmatpush1.bf16.msra.mxu0 0
    %1202 = vmatprep.subr.bf16.mxu0 0
    %1203 = vmatpush1.bf16.msra.mxu0 0
    %1204 = vmatprep.subr.bf16.mxu0 0
    %1205 = vmatpush1.bf16.msra.mxu0 0
    %1206 = vmatprep.subr.bf16.mxu0 0
    %1207 = vmatpush1.bf16.msra.mxu0 0
    %1208 = vmatprep.mubr.bf16.mxu0 0
    %1209 = vmatmul.mubr.bf16.gmra.mrb[0].mxu0 %v1174
    %v1210 = vpop.f32.mrb[0].mxu0
    %v1211 = vadd.f32 0.0, %v1210
    %v1212 = vpop.f32.mrb[0].mxu0
    %v1213 = vpop.f32.mrb[0].mxu0
    %v1214 = vadd.f32 0.0, %v1213
    %v1215 = vpop.f32.mrb[0].mxu0
    %1216 = vdwg.mxu0
    %v1217 = vmax.f32 %v1211, 0.0
    %v1218 = vmax.f32 %v1214, 0.0
    %v1219 = vpack.c.bf16 %v1218, %v1217
    %v1220 = vld [vmem:[%s5] sm:$0xf]
    %v1221 = vld [vmem:[%s5 + $0x4] sm:$0xf]
    %v1222 = vld [vmem:[%s5 + $0x8] sm:$0xf]
    %v1223 = vld [vmem:[%s5 + $0xc] sm:$0xf]
    %v1224 = vld [vmem:[%s5 + $0x10] sm:$0xf]
    %v1225 = vld [vmem:[%s5 + $0x14] sm:$0xf]
    %v1226 = vld [vmem:[%s5 + $0x18] sm:$0xf]
    %v1227 = vld [vmem:[%s5 + $0x1c] sm:$0xf]
    %v1236 = vunpack.c.l.b16 %v1220
    %v1237 = vunpack.c.l.b16 %v1221
    %v1238 = vunpack.c.l.b16 %v1222
    %v1239 = vunpack.c.l.b16 %v1223
    %v1240 = vunpack.c.l.b16 %v1224
    %v1241 = vunpack.c.l.b16 %v1225
    %v1242 = vunpack.c.l.b16 %v1226
    %v1243 = vunpack.c.l.b16 %v1227
    %v1244 = vpack.c.b16 %v1237, %v1236
    %v1245 = vpack.c.b16 %v1239, %v1238
    %v1246 = vpack.c.b16 %v1241, %v1240
    %v1247 = vpack.c.b16 %v1243, %v1242
    %vm1252 = vcmask 523264
    %v1254 = vsel %vm1252, %v1219, 0
    %1256 = vmatprep.subr.bf16.mxu0 0
    %1257 = vmatpush1.bf16.msra.mxu0 %v1244
    %1258 = vmatprep.subr.bf16.mxu0 0
    %1259 = vmatpush1.bf16.msra.mxu0 %v1245
    %1260 = vmatprep.subr.bf16.mxu0 0
    %1261 = vmatpush1.bf16.msra.mxu0 %v1246
    %1262 = vmatprep.subr.bf16.mxu0 0
    %1263 = vmatpush1.bf16.msra.mxu0 %v1247
    %1264 = vmatprep.subr.bf16.mxu0 0
    %1265 = vmatpush1.bf16.msra.mxu0 0
    %1266 = vmatprep.subr.bf16.mxu0 0
    %1267 = vmatpush1.bf16.msra.mxu0 0
    %1268 = vmatprep.subr.bf16.mxu0 0
    %1269 = vmatpush1.bf16.msra.mxu0 0
    %1270 = vmatprep.subr.bf16.mxu0 0
    %1271 = vmatpush1.bf16.msra.mxu0 0
    %1272 = vmatprep.subr.bf16.mxu0 0
    %1273 = vmatpush1.bf16.msra.mxu0 0
    %1274 = vmatprep.subr.bf16.mxu0 0
    %1275 = vmatpush1.bf16.msra.mxu0 0
    %1276 = vmatprep.subr.bf16.mxu0 0
    %1277 = vmatpush1.bf16.msra.mxu0 0
    %1278 = vmatprep.subr.bf16.mxu0 0
    %1279 = vmatpush1.bf16.msra.mxu0 0
    %1280 = vmatprep.subr.bf16.mxu0 0
    %1281 = vmatpush1.bf16.msra.mxu0 0
    %1282 = vmatprep.subr.bf16.mxu0 0
    %1283 = vmatpush1.bf16.msra.mxu0 0
    %1284 = vmatprep.subr.bf16.mxu0 0
    %1285 = vmatpush1.bf16.msra.mxu0 0
    %1286 = vmatprep.subr.bf16.mxu0 0
    %1287 = vmatpush1.bf16.msra.mxu0 0
    %1288 = vmatprep.mubr.bf16.mxu0 0
    %1289 = vmatmul.mubr.bf16.gmra.mrb[0].mxu0 %v1254
    %v1290 = vpop.f32.mrb[0].mxu0
    %v1291 = vadd.f32 0.0, %v1290
    %v1292 = vpop.f32.mrb[0].mxu0
    %v1293 = vpop.f32.mrb[0].mxu0
    %v1294 = vadd.f32 0.0, %v1293
    %v1295 = vpop.f32.mrb[0].mxu0
    %1296 = vdwg.mxu0
    %v1297 = vadd.f32 %v1132, %v1291
    %v1298 = vadd.f32 %v1133, %v1294
    %1299 = vst.msk [vmem:[#allocation4] sm:$0xff] %vm33, %v1297
    %1300 = vst.msk [vmem:[#allocation4 + $0x8] sm:$0xff] %vm33, %v1298
    // Predicated region
    $region30: #{tpu_custom_call.1} parent=1 // pred_check
      _
    $region31: #{tpu_custom_call.1} parent=1 // pred_check_branch
      %1302 = sbr.rel (0) target = $region33
    $region32: #{tpu_custom_call.1} parent=1 // pred_region
      %s1304 = ssub.s32 256, 256
      %1305 = vsyncadd [#allocation5], %s1304
      %s1306 = sshll.u32 [#allocation4], 4
      %s1307 = int_to_ptr.vmem [resolvable:$true] %s1306
      %1312 = dma.vmem_to_hbm [thread:$0]  %s1307, 256, %s7, [#allocation5], 128, 128, 8
    $region33: #{tpu_custom_call.1} parent=1 // pred_fallthru
      _
    // Predicated region
    $region34: #{tpu_custom_call.1} parent=1 // pred_check
      _
    $region35: #{tpu_custom_call.1} parent=1 // pred_check_branch
      %1314 = sbr.rel (0) target = $region37
    $region36: #{tpu_custom_call.1} parent=1 // pred_region
      %1315 = dma.done [#allocation5], 256
    $region37: #{tpu_custom_call.1} parent=1 // pred_fallthru
      _
    %1316 = vsyncpa [#allocation5], 1

</llo_original>
